<compile_context>
chip_gen: v5e
topology: v5e:2x2
jax: 0.10.0
libtpu: 0.0.40
codegen_flags: <defaults>
</compile_context>

<pallas_src>
import functools
import math

import jax
import jax.numpy as jnp
from jax import lax
from jax.experimental import pallas as pl
from jax.experimental.pallas import tpu as pltpu

# ----------------------------- configuration -------------------------------
HIDDEN = 256
NUM_HEADS = 2
NUM_KV_HEADS = 1
HEAD_DIM = HIDDEN // NUM_HEADS          # 128 (one lane width)
INTERMEDIATE = 512
RMS_EPS = 1e-6
ROPE_THETA = 10000.0


# ------------------------------- fused kernel -------------------------------
def _decoder_layer_kernel(x_ref, ln1_ref, wqkv_ref, bqkv_ref,
                          cosq_ref, sinq_ref, cosk_ref, sink_ref,
                          wo_ref, ln2_ref, wgu_ref, wdown_ref,
                          o_ref, *, eps, num_heads, num_kv_heads, head_dim):
    btile, t, hidden = x_ref.shape
    m = btile * t
    d = head_dim
    groups = num_heads // num_kv_heads

    # Fold batch into the matmul M dimension.
    x = x_ref[...].astype(jnp.float32).reshape(m, hidden)     # [M, H]

    # ---- input RMSNorm (f32) ----
    var = jnp.mean(x * x, axis=-1, keepdims=True)
    h1 = x * lax.rsqrt(var + eps) * ln1_ref[...]

    # ---- fused QKV projection (bf16 MXU, f32 accumulate) ----
    qkv = jnp.dot(h1.astype(jnp.bfloat16), wqkv_ref[...],
                  preferred_element_type=jnp.float32) + bqkv_ref[...]
    q_all = qkv[:, : num_heads * d]                            # [M, nH*D]
    k_all = qkv[:, num_heads * d: (num_heads + num_kv_heads) * d]
    v_all = qkv[:, (num_heads + num_kv_heads) * d:]

    cos_q = cosq_ref[...][None]     # [1, T, D]  (includes 1/sqrt(D) scale)
    sin_q = sinq_ref[...][None]     # [1, T, D]  (scale + rotate_half sign)
    cos_k = cosk_ref[...][None]
    sin_k = sink_ref[...][None]

    # Causal mask tiled for the stacked query heads: [groups*T, T].
    causal_tt = (lax.broadcasted_iota(jnp.int32, (t, t), 1)
                 <= lax.broadcasted_iota(jnp.int32, (t, t), 0))
    causal = jnp.tile(causal_tt, (groups, 1))
    neg_inf = jnp.float32(-1e30)

    # ---- attention: per KV head, all its query heads stacked in one matmul --
    head_outs = [None] * num_heads
    for g in range(num_kv_heads):
        kh = k_all[:, g * d:(g + 1) * d].reshape(btile, t, d)
        kh = kh * cos_k + pltpu.roll(kh, shift=d // 2, axis=2) * sin_k
        kh = kh.astype(jnp.bfloat16)
        vh = v_all[:, g * d:(g + 1) * d].reshape(btile, t, d).astype(jnp.bfloat16)

        q_rows = []
        for hh in range(g * groups, (g + 1) * groups):
            qh = q_all[:, hh * d:(hh + 1) * d].reshape(btile, t, d)
            qh = qh * cos_q + pltpu.roll(qh, shift=d // 2, axis=2) * sin_q
            q_rows.append(qh)
        q_stk = jnp.concatenate(q_rows, axis=1).astype(jnp.bfloat16)  # [B, g*T, D]

        s = jnp.einsum('bqd,bkd->bqk', q_stk, kh,
                       preferred_element_type=jnp.float32)      # [B, g*T, T]
        s = jnp.where(causal[None], s, neg_inf)
        mx = jnp.max(s, axis=-1, keepdims=True)
        p = jnp.exp(s - mx)                                     # f32 softmax numer
        l = jnp.sum(p, axis=-1, keepdims=True)
        o = jnp.einsum('bqk,bkd->bqd', p.astype(jnp.bfloat16), vh,
                       preferred_element_type=jnp.float32)      # [B, g*T, D]
        o = o * pl.reciprocal(l, approx=True)                   # defer softmax div
        for idx, hh in enumerate(range(g * groups, (g + 1) * groups)):
            head_outs[hh] = o[:, idx * t:(idx + 1) * t, :]      # [B, T, D]

    attn = jnp.concatenate(head_outs, axis=-1).reshape(m, num_heads * d)  # [M, H]

    # ---- o_proj + first residual ----
    hid = jnp.dot(attn.astype(jnp.bfloat16), wo_ref[...],
                  preferred_element_type=jnp.float32) + x

    # ---- post-attention RMSNorm + fused SwiGLU MLP + second residual ----
    var2 = jnp.mean(hid * hid, axis=-1, keepdims=True)
    h2 = hid * lax.rsqrt(var2 + eps) * ln2_ref[...]
    gu = jnp.dot(h2.astype(jnp.bfloat16), wgu_ref[...],
                 preferred_element_type=jnp.float32)            # [M, 2*I]
    inter = gu.shape[1] // 2
    act = jax.nn.silu(gu[:, :inter]) * gu[:, inter:]            # f32 SiLU
    out = jnp.dot(act.astype(jnp.bfloat16), wdown_ref[...],
                  preferred_element_type=jnp.float32) + hid
    o_ref[...] = out.reshape(btile, t, hidden).astype(o_ref.dtype)


# -------------------------- host-side preparation ----------------------------
def rope_cos_sin(t, d, theta=ROPE_THETA):
    inv_freq = 1.0 / (theta ** (jnp.arange(0, d, 2, dtype=jnp.float32) / d))
    pos = jnp.arange(t, dtype=jnp.float32)
    freqs = jnp.outer(pos, inv_freq)                     # [t, d/2]
    emb = jnp.concatenate([freqs, freqs], axis=-1)       # [t, d]
    return jnp.cos(emb), jnp.sin(emb)


def prepare_decoder_params(p, t):
    """One-time fusion / casting / RoPE-table build (hoisted out of the call)."""
    scale = 1.0 / math.sqrt(HEAD_DIM)
    cos, sin = rope_cos_sin(t, HEAD_DIM)
    sign = jnp.where(jnp.arange(HEAD_DIM) < HEAD_DIM // 2, -1.0, 1.0)
    sin_signed = sin * sign.astype(jnp.float32)
    prepared = {
        "wqkv": jnp.concatenate([p["q_w"], p["k_w"], p["v_w"]],
                                axis=1).astype(jnp.bfloat16),       # [H, 2H]
        "bqkv": jnp.concatenate([p["q_b"], p["k_b"], p["v_b"]]
                                ).reshape(1, -1).astype(jnp.float32),
        "wo": p["o_w"].astype(jnp.bfloat16),                         # [H, H]
        "wgu": jnp.concatenate([p["gate_w"], p["up_w"]],
                               axis=1).astype(jnp.bfloat16),         # [H, 2I]
        "wdown": p["down_w"].astype(jnp.bfloat16),                   # [I, H]
        "ln1": p["input_layernorm"].reshape(1, -1).astype(jnp.float32),
        "ln2": p["post_attention_layernorm"].reshape(1, -1).astype(jnp.float32),
        "cos_q": (cos * scale).astype(jnp.float32),
        "sin_q": (sin_signed * scale).astype(jnp.float32),
        "cos_k": cos.astype(jnp.float32),
        "sin_k": sin_signed.astype(jnp.float32),
    }
    return prepared


def _choose_btile(b, t, target_rows=512):
    """Largest divisor of b with btile*t <= target_rows (>= 1)."""
    best = 1
    for cand in range(1, b + 1):
        if b % cand == 0 and cand * t <= target_rows:
            best = cand
    return best


# ------------------------------- wrapper -------------------------------------
def rwkv_hybrid_decoder_layer(x, prepared, *, btile=None):
    b, t, h = x.shape
    if btile is None:
        btile = _choose_btile(b, t)
    assert b % btile == 0
    grid = (b // btile,)

    qkv_dim = prepared["wqkv"].shape[1]
    gu_dim = prepared["wgu"].shape[1]
    inter = prepared["wdown"].shape[0]

    # Advisory cost estimate for the XLA scheduler.
    m_total = b * t
    flops = int(2 * m_total * h * (qkv_dim + h + gu_dim)
                + 2 * m_total * inter * h
                + 4 * b * NUM_HEADS * t * t * HEAD_DIM)
    transcendentals = int(b * NUM_HEADS * t * t + m_total * inter + 2 * m_total)
    weight_bytes = sum(int(prepared[k].size) * int(prepared[k].dtype.itemsize)
                       for k in prepared)
    bytes_accessed = int(2 * m_total * h * 4 + weight_bytes)

    kernel = functools.partial(
        _decoder_layer_kernel, eps=RMS_EPS, num_heads=NUM_HEADS,
        num_kv_heads=NUM_KV_HEADS, head_dim=HEAD_DIM)

    def const(arr):
        nd = arr.ndim
        return pl.BlockSpec(arr.shape, lambda bi: (0,) * nd)

    return pl.pallas_call(
        kernel,
        out_shape=jax.ShapeDtypeStruct((b, t, h), jnp.float32),
        grid=grid,
        in_specs=[
            pl.BlockSpec((btile, t, h), lambda bi: (bi, 0, 0)),   # x (batch block)
            const(prepared["ln1"]),
            const(prepared["wqkv"]),
            const(prepared["bqkv"]),
            const(prepared["cos_q"]),
            const(prepared["sin_q"]),
            const(prepared["cos_k"]),
            const(prepared["sin_k"]),
            const(prepared["wo"]),
            const(prepared["ln2"]),
            const(prepared["wgu"]),
            const(prepared["wdown"]),
        ],
        out_specs=pl.BlockSpec((btile, t, h), lambda bi: (bi, 0, 0)),
        compiler_params=pltpu.CompilerParams(
            dimension_semantics=("parallel",)),
        cost_estimate=pl.CostEstimate(
            flops=flops, transcendentals=transcendentals,
            bytes_accessed=bytes_accessed),
    )(x, prepared["ln1"], prepared["wqkv"], prepared["bqkv"],
      prepared["cos_q"], prepared["sin_q"], prepared["cos_k"], prepared["sin_k"],
      prepared["wo"], prepared["ln2"], prepared["wgu"], prepared["wdown"])


# -------------------------- pure-JAX reference -------------------------------
def _reference_layer(x, p):
    """Mirrors the kernel math (bf16 MXU operands, f32 accumulation)."""
    def rms(z, w):
        var = jnp.mean(z * z, axis=-1, keepdims=True)
        return z * lax.rsqrt(var + RMS_EPS) * w

    def mm(a, w):
        return jnp.dot(a.astype(jnp.bfloat16), w.astype(jnp.bfloat16),
                       preferred_element_type=jnp.float32)

    def rot_half(z):
        return jnp.concatenate(
            [-z[..., HEAD_DIM // 2:], z[..., :HEAD_DIM // 2]], axis=-1)

    b, t, h = x.shape
    h1 = rms(x, p["input_layernorm"])
    q = (mm(h1, p["q_w"]) + p["q_b"]).reshape(b, t, NUM_HEADS, HEAD_DIM)
    k = (mm(h1, p["k_w"]) + p["k_b"]).reshape(b, t, NUM_KV_HEADS, HEAD_DIM)
    v = (mm(h1, p["v_w"]) + p["v_b"]).reshape(b, t, NUM_KV_HEADS, HEAD_DIM)
    q = q.transpose(0, 2, 1, 3)
    k = k.transpose(0, 2, 1, 3)
    v = v.transpose(0, 2, 1, 3)
    cos, sin = rope_cos_sin(t, HEAD_DIM)
    cos = cos[None, None]
    sin = sin[None, None]
    q = q * cos + rot_half(q) * sin
    k = k * cos + rot_half(k) * sin
    groups = NUM_HEADS // NUM_KV_HEADS
    k = jnp.repeat(k, groups, axis=1)
    v = jnp.repeat(v, groups, axis=1)
    s = jnp.einsum("bhqd,bhkd->bhqk",
                   q.astype(jnp.bfloat16), k.astype(jnp.bfloat16),
                   preferred_element_type=jnp.float32) / math.sqrt(HEAD_DIM)
    causal = jnp.tril(jnp.ones((t, t), dtype=bool))
    s = jnp.where(causal[None, None], s, -1e30)
    p_attn = jax.nn.softmax(s, axis=-1)
    a = jnp.einsum("bhqk,bhkd->bhqd",
                   p_attn.astype(jnp.bfloat16), v.astype(jnp.bfloat16),
                   preferred_element_type=jnp.float32)
    a = a.transpose(0, 2, 1, 3).reshape(b, t, NUM_HEADS * HEAD_DIM)
    hid = mm(a, p["o_w"]) + x
    h2 = rms(hid, p["post_attention_layernorm"])
    m = jax.nn.silu(mm(h2, p["gate_w"])) * mm(h2, p["up_w"])
    return hid + mm(m, p["down_w"])


# --------------------------------- main --------------------------------------
def _init_params(key):
    ks = jax.random.split(key, 12)
    norm = lambda k, shp: (0.02 * jax.random.normal(k, shp)).astype(jnp.float32)
    return {
        "input_layernorm": 1.0 + norm(ks[0], (HIDDEN,)),
        "post_attention_layernorm": 1.0 + norm(ks[1], (HIDDEN,)),
        "q_w": norm(ks[2], (HIDDEN, NUM_HEADS * HEAD_DIM)),
        "q_b": norm(ks[3], (NUM_HEADS * HEAD_DIM,)),
        "k_w": norm(ks[4], (HIDDEN, NUM_KV_HEADS * HEAD_DIM)),
        "k_b": norm(ks[5], (NUM_KV_HEADS * HEAD_DIM,)),
        "v_w": norm(ks[6], (HIDDEN, NUM_KV_HEADS * HEAD_DIM)),
        "v_b": norm(ks[7], (NUM_KV_HEADS * HEAD_DIM,)),
        "o_w": norm(ks[8], (NUM_HEADS * HEAD_DIM, HIDDEN)),
        "gate_w": norm(ks[9], (HIDDEN, INTERMEDIATE)),
        "up_w": norm(ks[10], (HIDDEN, INTERMEDIATE)),
        "down_w": norm(ks[11], (INTERMEDIATE, HIDDEN)),
    }


if __name__ == "__main__":
    B, T = 2, 8
    key = jax.random.PRNGKey(0)
    k_x, k_p = jax.random.split(key)
    x = jax.random.normal(k_x, (B, T, HIDDEN), dtype=jnp.float32)
    params = _init_params(k_p)

    # One-time parameter preparation (fused weights, bf16 casts, RoPE tables).
    prepared = prepare_decoder_params(params, T)
    prepared = jax.tree_util.tree_map(jax.block_until_ready, prepared)

    out = rwkv_hybrid_decoder_layer(x, prepared)
    out = jax.block_until_ready(out)

    ref = _reference_layer(x, params)
    assert out.shape == (B, T, HIDDEN)
    max_err = float(jnp.max(jnp.abs(out - ref)))
    assert jnp.allclose(out, ref, atol=2e-2, rtol=2e-2), max_err

    print("KERNEL_OK")
</pallas_src>

<mosaic_0001>
module attributes {stable_mosaic.version = 11 : i64} {
  func.func @_decoder_layer_kernel(%arg0: i32, %arg1: memref<2x8x256xf32, #tpu.memory_space<vmem>>, %arg2: memref<1x256xf32, #tpu.memory_space<vmem>>, %arg3: memref<256x512xbf16, #tpu.memory_space<vmem>>, %arg4: memref<1x512xf32, #tpu.memory_space<vmem>>, %arg5: memref<8x128xf32, #tpu.memory_space<vmem>>, %arg6: memref<8x128xf32, #tpu.memory_space<vmem>>, %arg7: memref<8x128xf32, #tpu.memory_space<vmem>>, %arg8: memref<8x128xf32, #tpu.memory_space<vmem>>, %arg9: memref<256x256xbf16, #tpu.memory_space<vmem>>, %arg10: memref<1x256xf32, #tpu.memory_space<vmem>>, %arg11: memref<256x1024xbf16, #tpu.memory_space<vmem>>, %arg12: memref<512x256xbf16, #tpu.memory_space<vmem>>, %arg13: memref<2x8x256xf32, #tpu.memory_space<vmem>>) attributes {dimension_semantics = [#tpu.dimension_semantics<parallel>], iteration_bounds = array<i64: 1>, scalar_prefetch = 0 : i64, scratch_operands = 0 : i64, tpu.core_type = #tpu.core_type<tc>, window_params = [{transform_indices = @transform_0, window_bounds = array<i64: 2, 8, 256>}, {pipeline_mode = #tpu.pipeline_mode<synchronous>, transform_indices = @transform_1, window_bounds = array<i64: 1, 256>}, {pipeline_mode = #tpu.pipeline_mode<synchronous>, transform_indices = @transform_2, window_bounds = array<i64: 256, 512>}, {pipeline_mode = #tpu.pipeline_mode<synchronous>, transform_indices = @transform_3, window_bounds = array<i64: 1, 512>}, {pipeline_mode = #tpu.pipeline_mode<synchronous>, transform_indices = @transform_4, window_bounds = array<i64: 8, 128>}, {pipeline_mode = #tpu.pipeline_mode<synchronous>, transform_indices = @transform_5, window_bounds = array<i64: 8, 128>}, {pipeline_mode = #tpu.pipeline_mode<synchronous>, transform_indices = @transform_6, window_bounds = array<i64: 8, 128>}, {pipeline_mode = #tpu.pipeline_mode<synchronous>, transform_indices = @transform_7, window_bounds = array<i64: 8, 128>}, {pipeline_mode = #tpu.pipeline_mode<synchronous>, transform_indices = @transform_8, window_bounds = array<i64: 256, 256>}, {pipeline_mode = #tpu.pipeline_mode<synchronous>, transform_indices = @transform_9, window_bounds = array<i64: 1, 256>}, {pipeline_mode = #tpu.pipeline_mode<synchronous>, transform_indices = @transform_10, window_bounds = array<i64: 256, 1024>}, {pipeline_mode = #tpu.pipeline_mode<synchronous>, transform_indices = @transform_11, window_bounds = array<i64: 512, 256>}, {transform_indices = @transform_12, window_bounds = array<i64: 2, 8, 256>}]} {
    %c0 = arith.constant 0 : index
    %c0_0 = arith.constant 0 : index
    %c0_1 = arith.constant 0 : index
    %0 = vector.load %arg1[%c0, %c0_0, %c0_1] : memref<2x8x256xf32, #tpu.memory_space<vmem>>, vector<2x8x256xf32>
    %1 = vector.shape_cast %0 : vector<2x8x256xf32> to vector<16x256xf32>
    %2 = arith.mulf %1, %1 : vector<16x256xf32>
    %cst = arith.constant dense<0.000000e+00> : vector<16xf32>
    %3 = vector.multi_reduction <add>, %2, %cst [1] : vector<16x256xf32> to vector<16xf32>
    %4 = vector.shape_cast %3 : vector<16xf32> to vector<16x1xf32>
    %cst_2 = arith.constant 2.560000e+02 : f32
    %5 = vector.broadcast %cst_2 : f32 to vector<16x1xf32>
    %6 = arith.divf %4, %5 : vector<16x1xf32>
    %cst_3 = arith.constant 9.99999997E-7 : f32
    %7 = vector.broadcast %cst_3 : f32 to vector<16x1xf32>
    %8 = arith.addf %6, %7 : vector<16x1xf32>
    %9 = math.rsqrt %8 : vector<16x1xf32>
    %10 = vector.broadcast %9 : vector<16x1xf32> to vector<16x256xf32>
    %11 = arith.mulf %1, %10 : vector<16x256xf32>
    %c0_4 = arith.constant 0 : index
    %c0_5 = arith.constant 0 : index
    %12 = vector.load %arg2[%c0_4, %c0_5] : memref<1x256xf32, #tpu.memory_space<vmem>>, vector<1x256xf32>
    %13 = vector.broadcast %12 : vector<1x256xf32> to vector<16x256xf32>
    %14 = arith.mulf %11, %13 : vector<16x256xf32>
    %15 = arith.truncf %14 : vector<16x256xf32> to vector<16x256xbf16>
    %c0_6 = arith.constant 0 : index
    %c0_7 = arith.constant 0 : index
    %16 = vector.load %arg3[%c0_6, %c0_7] : memref<256x512xbf16, #tpu.memory_space<vmem>>, vector<256x512xbf16>
    %cst_8 = arith.constant dense<0.000000e+00> : vector<16x512xf32>
    %17 = tpu.matmul %15, %16, %cst_8 {dimension_numbers = #tpu.dot_dimension_numbers<[1], [0], [0], [1], [0, 0, 1, 1], [], []>} : vector<16x256xbf16>, vector<256x512xbf16>, vector<16x512xf32> -> vector<16x512xf32>
    %c0_9 = arith.constant 0 : index
    %c0_10 = arith.constant 0 : index
    %18 = vector.load %arg4[%c0_9, %c0_10] : memref<1x512xf32, #tpu.memory_space<vmem>>, vector<1x512xf32>
    %19 = vector.broadcast %18 : vector<1x512xf32> to vector<16x512xf32>
    %20 = arith.addf %17, %19 : vector<16x512xf32>
    %21 = vector.extract_strided_slice %20 {offsets = [0, 0], sizes = [16, 256], strides = [1, 1]} : vector<16x512xf32> to vector<16x256xf32>
    %22 = vector.extract_strided_slice %20 {offsets = [0, 256], sizes = [16, 128], strides = [1, 1]} : vector<16x512xf32> to vector<16x128xf32>
    %23 = vector.extract_strided_slice %20 {offsets = [0, 384], sizes = [16, 128], strides = [1, 1]} : vector<16x512xf32> to vector<16x128xf32>
    %c0_11 = arith.constant 0 : index
    %c0_12 = arith.constant 0 : index
    %24 = vector.load %arg5[%c0_11, %c0_12] : memref<8x128xf32, #tpu.memory_space<vmem>>, vector<8x128xf32>
    %25 = vector.shape_cast %24 : vector<8x128xf32> to vector<1x8x128xf32>
    %c0_13 = arith.constant 0 : index
    %c0_14 = arith.constant 0 : index
    %26 = vector.load %arg6[%c0_13, %c0_14] : memref<8x128xf32, #tpu.memory_space<vmem>>, vector<8x128xf32>
    %27 = vector.shape_cast %26 : vector<8x128xf32> to vector<1x8x128xf32>
    %c0_15 = arith.constant 0 : index
    %c0_16 = arith.constant 0 : index
    %28 = vector.load %arg7[%c0_15, %c0_16] : memref<8x128xf32, #tpu.memory_space<vmem>>, vector<8x128xf32>
    %29 = vector.shape_cast %28 : vector<8x128xf32> to vector<1x8x128xf32>
    %c0_17 = arith.constant 0 : index
    %c0_18 = arith.constant 0 : index
    %30 = vector.load %arg8[%c0_17, %c0_18] : memref<8x128xf32, #tpu.memory_space<vmem>>, vector<8x128xf32>
    %31 = vector.shape_cast %30 : vector<8x128xf32> to vector<1x8x128xf32>
    %32 = tpu.iota {dimensions = array<i32: 1>} : vector<8x8xi32>
    %33 = tpu.iota {dimensions = array<i32: 0>} : vector<8x8xi32>
    %34 = arith.cmpi sle, %32, %33 : vector<8x8xi32>
    %35 = tpu.concatenate %34, %34 in 0 : vector<8x8xi1>, vector<8x8xi1> -> vector<16x8xi1>
    %36 = vector.shape_cast %22 : vector<16x128xf32> to vector<2x8x128xf32>
    %37 = vector.broadcast %29 : vector<1x8x128xf32> to vector<2x8x128xf32>
    %38 = arith.mulf %36, %37 : vector<2x8x128xf32>
    %c64_i32 = arith.constant 64 : i32
    %39 = tpu.dynamic_rotate %36 by %c64_i32 dim 2 : vector<2x8x128xf32>, i32 -> vector<2x8x128xf32>
    %40 = vector.broadcast %31 : vector<1x8x128xf32> to vector<2x8x128xf32>
    %41 = arith.mulf %39, %40 : vector<2x8x128xf32>
    %42 = arith.addf %38, %41 : vector<2x8x128xf32>
    %43 = arith.truncf %42 : vector<2x8x128xf32> to vector<2x8x128xbf16>
    %44 = vector.shape_cast %23 : vector<16x128xf32> to vector<2x8x128xf32>
    %45 = arith.truncf %44 : vector<2x8x128xf32> to vector<2x8x128xbf16>
    %46 = vector.extract_strided_slice %21 {offsets = [0, 0], sizes = [16, 128], strides = [1, 1]} : vector<16x256xf32> to vector<16x128xf32>
    %47 = vector.shape_cast %46 : vector<16x128xf32> to vector<2x8x128xf32>
    %48 = vector.broadcast %25 : vector<1x8x128xf32> to vector<2x8x128xf32>
    %49 = arith.mulf %47, %48 : vector<2x8x128xf32>
    %c64_i32_19 = arith.constant 64 : i32
    %50 = tpu.dynamic_rotate %47 by %c64_i32_19 dim 2 : vector<2x8x128xf32>, i32 -> vector<2x8x128xf32>
    %51 = vector.broadcast %27 : vector<1x8x128xf32> to vector<2x8x128xf32>
    %52 = arith.mulf %50, %51 : vector<2x8x128xf32>
    %53 = arith.addf %49, %52 : vector<2x8x128xf32>
    %54 = vector.extract_strided_slice %21 {offsets = [0, 128], sizes = [16, 128], strides = [1, 1]} : vector<16x256xf32> to vector<16x128xf32>
    %55 = vector.shape_cast %54 : vector<16x128xf32> to vector<2x8x128xf32>
    %56 = vector.broadcast %25 : vector<1x8x128xf32> to vector<2x8x128xf32>
    %57 = arith.mulf %55, %56 : vector<2x8x128xf32>
    %c64_i32_20 = arith.constant 64 : i32
    %58 = tpu.dynamic_rotate %55 by %c64_i32_20 dim 2 : vector<2x8x128xf32>, i32 -> vector<2x8x128xf32>
    %59 = vector.broadcast %27 : vector<1x8x128xf32> to vector<2x8x128xf32>
    %60 = arith.mulf %58, %59 : vector<2x8x128xf32>
    %61 = arith.addf %57, %60 : vector<2x8x128xf32>
    %62 = tpu.concatenate %53, %61 in 1 : vector<2x8x128xf32>, vector<2x8x128xf32> -> vector<2x16x128xf32>
    %63 = arith.truncf %62 : vector<2x16x128xf32> to vector<2x16x128xbf16>
    "tpu.trace_start"() <{level = 10 : i32, message = "bqd,bkd->bqk"}> : () -> ()
    %cst_21 = arith.constant dense<0.000000e+00> : vector<2x16x8xf32>
    %64 = tpu.matmul %63, %43, %cst_21 {dimension_numbers = #tpu.dot_dimension_numbers<[2], [2], [1], [1], [0, 0, 0, 1, 1, 1], [0], [0]>} : vector<2x16x128xbf16>, vector<2x8x128xbf16>, vector<2x16x8xf32> -> vector<2x16x8xf32>
    "tpu.trace_stop"() : () -> ()
    %65 = vector.shape_cast %35 : vector<16x8xi1> to vector<1x16x8xi1>
    %cst_22 = arith.constant -1.000000e+30 : f32
    %66 = vector.shape_cast %65 : vector<1x16x8xi1> to vector<1x16x8xi1>
    %67 = vector.broadcast %66 : vector<1x16x8xi1> to vector<2x16x8xi1>
    %68 = vector.broadcast %cst_22 : f32 to vector<2x16x8xf32>
    %69 = arith.select %67, %64, %68 : vector<2x16x8xi1>, vector<2x16x8xf32>
    %cst_23 = arith.constant dense<0xFF800000> : vector<2x16xf32>
    %70 = vector.multi_reduction <maximumf>, %69, %cst_23 [2] : vector<2x16x8xf32> to vector<2x16xf32>
    %71 = vector.shape_cast %70 : vector<2x16xf32> to vector<2x16x1xf32>
    %72 = vector.broadcast %71 : vector<2x16x1xf32> to vector<2x16x8xf32>
    %73 = arith.subf %69, %72 : vector<2x16x8xf32>
    %74 = math.exp %73 : vector<2x16x8xf32>
    %cst_24 = arith.constant dense<0.000000e+00> : vector<2x16xf32>
    %75 = vector.multi_reduction <add>, %74, %cst_24 [2] : vector<2x16x8xf32> to vector<2x16xf32>
    %76 = vector.shape_cast %75 : vector<2x16xf32> to vector<2x16x1xf32>
    %77 = arith.truncf %74 : vector<2x16x8xf32> to vector<2x16x8xbf16>
    "tpu.trace_start"() <{level = 10 : i32, message = "bqk,bkd->bqd"}> : () -> ()
    %cst_25 = arith.constant dense<0.000000e+00> : vector<2x16x128xf32>
    %78 = tpu.matmul %77, %45, %cst_25 {dimension_numbers = #tpu.dot_dimension_numbers<[2], [1], [1], [2], [0, 0, 0, 1, 1, 2], [0], [0]>} : vector<2x16x8xbf16>, vector<2x8x128xbf16>, vector<2x16x128xf32> -> vector<2x16x128xf32>
    "tpu.trace_stop"() : () -> ()
    %79 = tpu.reciprocal %76 {approx = true} : vector<2x16x1xf32> -> vector<2x16x1xf32>
    %80 = vector.broadcast %79 : vector<2x16x1xf32> to vector<2x16x128xf32>
    %81 = arith.mulf %78, %80 : vector<2x16x128xf32>
    %82 = vector.extract_strided_slice %81 {offsets = [0, 0, 0], sizes = [2, 8, 128], strides = [1, 1, 1]} : vector<2x16x128xf32> to vector<2x8x128xf32>
    %83 = vector.extract_strided_slice %81 {offsets = [0, 8, 0], sizes = [2, 8, 128], strides = [1, 1, 1]} : vector<2x16x128xf32> to vector<2x8x128xf32>
    %84 = tpu.concatenate %82, %83 in 2 : vector<2x8x128xf32>, vector<2x8x128xf32> -> vector<2x8x256xf32>
    %85 = vector.shape_cast %84 : vector<2x8x256xf32> to vector<16x256xf32>
    %86 = arith.truncf %85 : vector<16x256xf32> to vector<16x256xbf16>
    %c0_26 = arith.constant 0 : index
    %c0_27 = arith.constant 0 : index
    %87 = vector.load %arg9[%c0_26, %c0_27] : memref<256x256xbf16, #tpu.memory_space<vmem>>, vector<256x256xbf16>
    %cst_28 = arith.constant dense<0.000000e+00> : vector<16x256xf32>
    %88 = tpu.matmul %86, %87, %cst_28 {dimension_numbers = #tpu.dot_dimension_numbers<[1], [0], [0], [1], [0, 0, 1, 1], [], []>} : vector<16x256xbf16>, vector<256x256xbf16>, vector<16x256xf32> -> vector<16x256xf32>
    %89 = arith.addf %88, %1 : vector<16x256xf32>
    %90 = arith.mulf %89, %89 : vector<16x256xf32>
    %cst_29 = arith.constant dense<0.000000e+00> : vector<16xf32>
    %91 = vector.multi_reduction <add>, %90, %cst_29 [1] : vector<16x256xf32> to vector<16xf32>
    %92 = vector.shape_cast %91 : vector<16xf32> to vector<16x1xf32>
    %cst_30 = arith.constant 2.560000e+02 : f32
    %93 = vector.broadcast %cst_30 : f32 to vector<16x1xf32>
    %94 = arith.divf %92, %93 : vector<16x1xf32>
    %cst_31 = arith.constant 9.99999997E-7 : f32
    %95 = vector.broadcast %cst_31 : f32 to vector<16x1xf32>
    %96 = arith.addf %94, %95 : vector<16x1xf32>
    %97 = math.rsqrt %96 : vector<16x1xf32>
    %98 = vector.broadcast %97 : vector<16x1xf32> to vector<16x256xf32>
    %99 = arith.mulf %89, %98 : vector<16x256xf32>
    %c0_32 = arith.constant 0 : index
    %c0_33 = arith.constant 0 : index
    %100 = vector.load %arg10[%c0_32, %c0_33] : memref<1x256xf32, #tpu.memory_space<vmem>>, vector<1x256xf32>
    %101 = vector.broadcast %100 : vector<1x256xf32> to vector<16x256xf32>
    %102 = arith.mulf %99, %101 : vector<16x256xf32>
    %103 = arith.truncf %102 : vector<16x256xf32> to vector<16x256xbf16>
    %c0_34 = arith.constant 0 : index
    %c0_35 = arith.constant 0 : index
    %104 = vector.load %arg11[%c0_34, %c0_35] : memref<256x1024xbf16, #tpu.memory_space<vmem>>, vector<256x1024xbf16>
    %cst_36 = arith.constant dense<0.000000e+00> : vector<16x1024xf32>
    %105 = tpu.matmul %103, %104, %cst_36 {dimension_numbers = #tpu.dot_dimension_numbers<[1], [0], [0], [1], [0, 0, 1, 1], [], []>} : vector<16x256xbf16>, vector<256x1024xbf16>, vector<16x1024xf32> -> vector<16x1024xf32>
    %106 = vector.extract_strided_slice %105 {offsets = [0, 0], sizes = [16, 512], strides = [1, 1]} : vector<16x1024xf32> to vector<16x512xf32>
    %107 = arith.negf %106 : vector<16x512xf32>
    %108 = math.exp %107 : vector<16x512xf32>
    %cst_37 = arith.constant 1.000000e+00 : f32
    %109 = vector.broadcast %cst_37 : f32 to vector<16x512xf32>
    %110 = arith.addf %109, %108 : vector<16x512xf32>
    %111 = arith.divf %109, %110 : vector<16x512xf32>
    %112 = arith.mulf %106, %111 : vector<16x512xf32>
    %113 = vector.extract_strided_slice %105 {offsets = [0, 512], sizes = [16, 512], strides = [1, 1]} : vector<16x1024xf32> to vector<16x512xf32>
    %114 = arith.mulf %112, %113 : vector<16x512xf32>
    %115 = arith.truncf %114 : vector<16x512xf32> to vector<16x512xbf16>
    %c0_38 = arith.constant 0 : index
    %c0_39 = arith.constant 0 : index
    %116 = vector.load %arg12[%c0_38, %c0_39] : memref<512x256xbf16, #tpu.memory_space<vmem>>, vector<512x256xbf16>
    %cst_40 = arith.constant dense<0.000000e+00> : vector<16x256xf32>
    %117 = tpu.matmul %115, %116, %cst_40 {dimension_numbers = #tpu.dot_dimension_numbers<[1], [0], [0], [1], [0, 0, 1, 1], [], []>} : vector<16x512xbf16>, vector<512x256xbf16>, vector<16x256xf32> -> vector<16x256xf32>
    %118 = arith.addf %117, %89 : vector<16x256xf32>
    %119 = vector.shape_cast %118 : vector<16x256xf32> to vector<2x8x256xf32>
    %c0_41 = arith.constant 0 : index
    %c0_42 = arith.constant 0 : index
    %c0_43 = arith.constant 0 : index
    %120 = vector.load %arg13[%c0_41, %c0_42, %c0_43] : memref<2x8x256xf32, #tpu.memory_space<vmem>>, vector<2x8x256xf32>
    tpu.vector_store %arg13[%c0_41, %c0_42, %c0_43], %119 {strides = array<i32>} : memref<2x8x256xf32, #tpu.memory_space<vmem>>, vector<2x8x256xf32>,
    return
  }
  func.func @transform_0(%arg0: i32) -> (i32, i32, i32) {
    %c0_i32 = arith.constant 0 : i32
    %c0_i32_0 = arith.constant 0 : i32
    %c0_i32_1 = arith.constant 0 : i32
    return %arg0, %c0_i32, %c0_i32_0 : i32, i32, i32
  }
  func.func @transform_1(%arg0: i32) -> (i32, i32) {
    %c0_i32 = arith.constant 0 : i32
    %c0_i32_0 = arith.constant 0 : i32
    %c0_i32_1 = arith.constant 0 : i32
    return %c0_i32, %c0_i32_0 : i32, i32
  }
  func.func @transform_2(%arg0: i32) -> (i32, i32) {
    %c0_i32 = arith.constant 0 : i32
    %c0_i32_0 = arith.constant 0 : i32
    %c0_i32_1 = arith.constant 0 : i32
    return %c0_i32, %c0_i32_0 : i32, i32
  }
  func.func @transform_3(%arg0: i32) -> (i32, i32) {
    %c0_i32 = arith.constant 0 : i32
    %c0_i32_0 = arith.constant 0 : i32
    %c0_i32_1 = arith.constant 0 : i32
    return %c0_i32, %c0_i32_0 : i32, i32
  }
  func.func @transform_4(%arg0: i32) -> (i32, i32) {
    %c0_i32 = arith.constant 0 : i32
    %c0_i32_0 = arith.constant 0 : i32
    %c0_i32_1 = arith.constant 0 : i32
    return %c0_i32, %c0_i32_0 : i32, i32
  }
  func.func @transform_5(%arg0: i32) -> (i32, i32) {
    %c0_i32 = arith.constant 0 : i32
    %c0_i32_0 = arith.constant 0 : i32
    %c0_i32_1 = arith.constant 0 : i32
    return %c0_i32, %c0_i32_0 : i32, i32
  }
  func.func @transform_6(%arg0: i32) -> (i32, i32) {
    %c0_i32 = arith.constant 0 : i32
    %c0_i32_0 = arith.constant 0 : i32
    %c0_i32_1 = arith.constant 0 : i32
    return %c0_i32, %c0_i32_0 : i32, i32
  }
  func.func @transform_7(%arg0: i32) -> (i32, i32) {
    %c0_i32 = arith.constant 0 : i32
    %c0_i32_0 = arith.constant 0 : i32
    %c0_i32_1 = arith.constant 0 : i32
    return %c0_i32, %c0_i32_0 : i32, i32
  }
  func.func @transform_8(%arg0: i32) -> (i32, i32) {
    %c0_i32 = arith.constant 0 : i32
    %c0_i32_0 = arith.constant 0 : i32
    %c0_i32_1 = arith.constant 0 : i32
    return %c0_i32, %c0_i32_0 : i32, i32
  }
  func.func @transform_9(%arg0: i32) -> (i32, i32) {
    %c0_i32 = arith.constant 0 : i32
    %c0_i32_0 = arith.constant 0 : i32
    %c0_i32_1 = arith.constant 0 : i32
    return %c0_i32, %c0_i32_0 : i32, i32
  }
  func.func @transform_10(%arg0: i32) -> (i32, i32) {
    %c0_i32 = arith.constant 0 : i32
    %c0_i32_0 = arith.constant 0 : i32
    %c0_i32_1 = arith.constant 0 : i32
    return %c0_i32, %c0_i32_0 : i32, i32
  }
  func.func @transform_11(%arg0: i32) -> (i32, i32) {
    %c0_i32 = arith.constant 0 : i32
    %c0_i32_0 = arith.constant 0 : i32
    %c0_i32_1 = arith.constant 0 : i32
    return %c0_i32, %c0_i32_0 : i32, i32
  }
  func.func @transform_12(%arg0: i32) -> (i32, i32, i32) {
    %c0_i32 = arith.constant 0 : i32
    %c0_i32_0 = arith.constant 0 : i32
    %c0_i32_1 = arith.constant 0 : i32
    return %arg0, %c0_i32, %c0_i32_0 : i32, i32, i32
  }
}

</mosaic_0001>

<llo_original>
// kernel: tpu_custom_call.1
$region0: #{tpu_custom_call.1}
  #allocation0 [shape = 'u32[]', space=smem, size = 0x4, offset = 0x4, fixed_abs, tag = 'smem constant byte address 0x4 - core index']
  #allocation1 [shape = 'u32[72,128]{1,0:T(1,128)}', space=vmem, size = 0x9000, scoped, tag = 'internal scratch']
  %s0 = inlined_call_operand.hbm [shape: f32[2,8,256], index: 0, kind: input, shape index: {}]
  %s1 = inlined_call_operand.hbm [shape: f32[1,256], index: 1, kind: input, shape index: {}]
  %s2 = inlined_call_operand.hbm [shape: bf16[256,512], index: 2, kind: input, shape index: {}]
  %s3 = inlined_call_operand.hbm [shape: f32[1,512], index: 3, kind: input, shape index: {}]
  %s4 = inlined_call_operand.hbm [shape: f32[8,128], index: 4, kind: input, shape index: {}]
  %s5 = inlined_call_operand.hbm [shape: f32[8,128], index: 5, kind: input, shape index: {}]
  %s6 = inlined_call_operand.hbm [shape: f32[8,128], index: 6, kind: input, shape index: {}]
  %s7 = inlined_call_operand.hbm [shape: f32[8,128], index: 7, kind: input, shape index: {}]
  %s8 = inlined_call_operand.hbm [shape: bf16[256,256], index: 8, kind: input, shape index: {}]
  %s9 = inlined_call_operand.vmem [shape: f32[1,256], index: 9, kind: input, shape index: {}]
  %s10 = inlined_call_operand.hbm [shape: bf16[256,1024], index: 10, kind: input, shape index: {}]
  %s11 = inlined_call_operand.hbm [shape: bf16[512,256], index: 11, kind: input, shape index: {}]
  %s12 = inlined_call_operand.hbm [shape: f32[2,8,256], index: 12, kind: output, shape index: {}]
  %s13 = sld [smem:[#allocation0]]
  $region102: #{tpu_custom_call.1} parent=0
    _
  %s15 = ssub.s32 1, %s13
  %s16 = scalar_select 0, %s15, %s13
  $region1: #{tpu_custom_call.1} parent=0
    #allocation2 [shape = 'u8[16384]{0}', space=vmem, size = 0x4000, scoped, tag = 'input window, operand 0, single buffered']
    #allocation3 [shape = 's32[1]{0}', space=sflag, size = 0x4, scoped, tag = 'scoped memory for tpu_custom_call.1']
    #allocation4 [shape = 's32[1]{0}', space=sflag, size = 0x4, scoped, tag = 'scoped memory for tpu_custom_call.1']
    #allocation5 [shape = 'u8[1024]{0}', space=vmem, size = 0x400, scoped, tag = 'input window, operand 1, single buffered']
    #allocation6 [shape = 's32[1]{0}', space=sflag, size = 0x4, scoped, tag = 'scoped memory for tpu_custom_call.1']
    #allocation7 [shape = 'u8[262144]{0}', space=vmem, size = 0x40000, scoped, tag = 'input window, operand 2, single buffered']
    #allocation8 [shape = 'u8[2048]{0}', space=vmem, size = 0x800, scoped, tag = 'input window, operand 3, single buffered']
    #allocation9 [shape = 's32[1]{0}', space=sflag, size = 0x4, scoped, tag = 'scoped memory for tpu_custom_call.1']
    #allocation10 [shape = 'u8[4096]{0}', space=vmem, size = 0x1000, scoped, tag = 'input window, operand 4, single buffered']
    #allocation11 [shape = 'u8[4096]{0}', space=vmem, size = 0x1000, scoped, tag = 'input window, operand 5, single buffered']
    #allocation12 [shape = 's32[1]{0}', space=sflag, size = 0x4, scoped, tag = 'scoped memory for tpu_custom_call.1']
    #allocation13 [shape = 'u8[4096]{0}', space=vmem, size = 0x1000, scoped, tag = 'input window, operand 6, single buffered']
    #allocation14 [shape = 'u8[4096]{0}', space=vmem, size = 0x1000, scoped, tag = 'input window, operand 7, single buffered']
    #allocation15 [shape = 's32[1]{0}', space=sflag, size = 0x4, scoped, tag = 'scoped memory for tpu_custom_call.1']
    #allocation16 [shape = 'u8[131072]{0}', space=vmem, size = 0x20000, scoped, tag = 'input window, operand 8, single buffered']
    #allocation17 [shape = 'u8[524288]{0}', space=vmem, size = 0x80000, scoped, tag = 'input window, operand 10, single buffered']
    #allocation18 [shape = 's32[1]{0}', space=sflag, size = 0x4, scoped, tag = 'scoped memory for tpu_custom_call.1']
    #allocation19 [shape = 'u8[262144]{0}', space=vmem, size = 0x40000, scoped, tag = 'input window, operand 11, single buffered']
    #allocation20 [shape = 'u8[16384]{0}', space=vmem, size = 0x4000, scoped, tag = 'output window, operand 0, single buffered']
    %17 = vsyncpa [#allocation3], 0
    %18 = vsyncpa [#allocation6], 0
    %19 = vsyncpa [#allocation9], 0
    %20 = vsyncpa [#allocation12], 0
    %21 = vsyncpa [#allocation15], 0
    %22 = vsyncpa [#allocation18], 0
    %23 = vsyncpa [#allocation4], 0
    // Predicated region
    $region2: #{tpu_custom_call.1} parent=1 // pred_check
      _
    $region3: #{tpu_custom_call.1} parent=1 // pred_check_branch
      %25 = sbr.rel (0) target = $region5
    $region4: #{tpu_custom_call.1} parent=1 // pred_region
      %27 = vsyncadd [#allocation3], 0
      %s28 = sshll.u32 %s0, 4
      %s29 = int_to_ptr.hbm [resolvable:$true] %s28
      %s30 = sshll.u32 [#allocation2], 4
      %s31 = int_to_ptr.vmem [resolvable:$true] %s30
      %36 = dma.hbm_to_vmem [thread:$0]  %s29, 512, %s31, [#allocation3], 256, 256, 16
    $region5: #{tpu_custom_call.1} parent=1 // pred_fallthru
      _
    // Predicated region
    $region6: #{tpu_custom_call.1} parent=1 // pred_check
      _
    $region7: #{tpu_custom_call.1} parent=1 // pred_check_branch
      %38 = sbr.rel (0) target = $region9
    $region8: #{tpu_custom_call.1} parent=1 // pred_region
      %40 = vsyncadd [#allocation6], 0
      %s42 = sshll.u32 %s1, 4
      %s43 = int_to_ptr.hbm [resolvable:$true] %s42
      %s44 = sshll.u32 [#allocation5], 4
      %s45 = int_to_ptr.vmem [resolvable:$true] %s44
      %47 = dma.hbm_to_vmem [thread:$0]  %s43, 32, %s45, [#allocation6]
    $region9: #{tpu_custom_call.1} parent=1 // pred_fallthru
      _
    // Predicated region
    $region10: #{tpu_custom_call.1} parent=1 // pred_check
      _
    $region11: #{tpu_custom_call.1} parent=1 // pred_check_branch
      %49 = sbr.rel (0) target = $region13
    $region12: #{tpu_custom_call.1} parent=1 // pred_region
      %51 = vsyncadd [#allocation6], 0
      %s52 = sshll.u32 %s2, 4
      %s53 = int_to_ptr.hbm [resolvable:$true] %s52
      %s54 = sshll.u32 [#allocation7], 4
      %s55 = int_to_ptr.vmem [resolvable:$true] %s54
      %60 = dma.hbm_to_vmem [thread:$0]  %s53, 8192, %s55, [#allocation6], 256, 256, 16
    $region13: #{tpu_custom_call.1} parent=1 // pred_fallthru
      _
    // Predicated region
    $region14: #{tpu_custom_call.1} parent=1 // pred_check
      _
    $region15: #{tpu_custom_call.1} parent=1 // pred_check_branch
      %62 = sbr.rel (0) target = $region17
    $region16: #{tpu_custom_call.1} parent=1 // pred_region
      %64 = vsyncadd [#allocation9], 0
      %s66 = sshll.u32 %s3, 4
      %s67 = int_to_ptr.hbm [resolvable:$true] %s66
      %s68 = sshll.u32 [#allocation8], 4
      %s69 = int_to_ptr.vmem [resolvable:$true] %s68
      %71 = dma.hbm_to_vmem [thread:$0]  %s67, 64, %s69, [#allocation9]
    $region17: #{tpu_custom_call.1} parent=1 // pred_fallthru
      _
    // Predicated region
    $region18: #{tpu_custom_call.1} parent=1 // pred_check
      _
    $region19: #{tpu_custom_call.1} parent=1 // pred_check_branch
      %73 = sbr.rel (0) target = $region21
    $region20: #{tpu_custom_call.1} parent=1 // pred_region
      %75 = vsyncadd [#allocation9], 0
      %s77 = sshll.u32 %s4, 4
      %s78 = int_to_ptr.hbm [resolvable:$true] %s77
      %s79 = sshll.u32 [#allocation10], 4
      %s80 = int_to_ptr.vmem [resolvable:$true] %s79
      %82 = dma.hbm_to_vmem [thread:$0]  %s78, 128, %s80, [#allocation9]
    $region21: #{tpu_custom_call.1} parent=1 // pred_fallthru
      _
    // Predicated region
    $region22: #{tpu_custom_call.1} parent=1 // pred_check
      _
    $region23: #{tpu_custom_call.1} parent=1 // pred_check_branch
      %84 = sbr.rel (0) target = $region25
    $region24: #{tpu_custom_call.1} parent=1 // pred_region
      %86 = vsyncadd [#allocation12], 0
      %s88 = sshll.u32 %s5, 4
      %s89 = int_to_ptr.hbm [resolvable:$true] %s88
      %s90 = sshll.u32 [#allocation11], 4
      %s91 = int_to_ptr.vmem [resolvable:$true] %s90
      %93 = dma.hbm_to_vmem [thread:$0]  %s89, 128, %s91, [#allocation12]
    $region25: #{tpu_custom_call.1} parent=1 // pred_fallthru
      _
    // Predicated region
    $region26: #{tpu_custom_call.1} parent=1 // pred_check
      _
    $region27: #{tpu_custom_call.1} parent=1 // pred_check_branch
      %95 = sbr.rel (0) target = $region29
    $region28: #{tpu_custom_call.1} parent=1 // pred_region
      %97 = vsyncadd [#allocation12], 0
      %s99 = sshll.u32 %s6, 4
      %s100 = int_to_ptr.hbm [resolvable:$true] %s99
      %s101 = sshll.u32 [#allocation13], 4
      %s102 = int_to_ptr.vmem [resolvable:$true] %s101
      %104 = dma.hbm_to_vmem [thread:$0]  %s100, 128, %s102, [#allocation12]
    $region29: #{tpu_custom_call.1} parent=1 // pred_fallthru
      _
    // Predicated region
    $region30: #{tpu_custom_call.1} parent=1 // pred_check
      _
    $region31: #{tpu_custom_call.1} parent=1 // pred_check_branch
      %106 = sbr.rel (0) target = $region33
    $region32: #{tpu_custom_call.1} parent=1 // pred_region
      %108 = vsyncadd [#allocation15], 0
      %s110 = sshll.u32 %s7, 4
      %s111 = int_to_ptr.hbm [resolvable:$true] %s110
      %s112 = sshll.u32 [#allocation14], 4
      %s113 = int_to_ptr.vmem [resolvable:$true] %s112
      %115 = dma.hbm_to_vmem [thread:$0]  %s111, 128, %s113, [#allocation15]
    $region33: #{tpu_custom_call.1} parent=1 // pred_fallthru
      _
    // Predicated region
    $region34: #{tpu_custom_call.1} parent=1 // pred_check
      _
    $region35: #{tpu_custom_call.1} parent=1 // pred_check_branch
      %117 = sbr.rel (0) target = $region37
    $region36: #{tpu_custom_call.1} parent=1 // pred_region
      %119 = vsyncadd [#allocation15], 0
      %s120 = sshll.u32 %s8, 4
      %s121 = int_to_ptr.hbm [resolvable:$true] %s120
      %s122 = sshll.u32 [#allocation16], 4
      %s123 = int_to_ptr.vmem [resolvable:$true] %s122
      %128 = dma.hbm_to_vmem [thread:$0]  %s121, 4096, %s123, [#allocation15], 128, 128, 8
    $region37: #{tpu_custom_call.1} parent=1 // pred_fallthru
      _
    // Predicated region
    $region38: #{tpu_custom_call.1} parent=1 // pred_check
      _
    $region39: #{tpu_custom_call.1} parent=1 // pred_check_branch
      %130 = sbr.rel (0) target = $region41
    $region40: #{tpu_custom_call.1} parent=1 // pred_region
      _
    $region41: #{tpu_custom_call.1} parent=1 // pred_fallthru
      _
    // Predicated region
    $region42: #{tpu_custom_call.1} parent=1 // pred_check
      _
    $region43: #{tpu_custom_call.1} parent=1 // pred_check_branch
      %132 = sbr.rel (0) target = $region45
    $region44: #{tpu_custom_call.1} parent=1 // pred_region
      %134 = vsyncadd [#allocation18], 0
      %s135 = sshll.u32 %s10, 4
      %s136 = int_to_ptr.hbm [resolvable:$true] %s135
      %s137 = sshll.u32 [#allocation17], 4
      %s138 = int_to_ptr.vmem [resolvable:$true] %s137
      %143 = dma.hbm_to_vmem [thread:$0]  %s136, 16384, %s138, [#allocation18], 512, 512, 32
    $region45: #{tpu_custom_call.1} parent=1 // pred_fallthru
      _
    // Predicated region
    $region46: #{tpu_custom_call.1} parent=1 // pred_check
      _
    $region47: #{tpu_custom_call.1} parent=1 // pred_check_branch
      %145 = sbr.rel (0) target = $region49
    $region48: #{tpu_custom_call.1} parent=1 // pred_region
      %147 = vsyncadd [#allocation18], 0
      %s148 = sshll.u32 %s11, 4
      %s149 = int_to_ptr.hbm [resolvable:$true] %s148
      %s150 = sshll.u32 [#allocation19], 4
      %s151 = int_to_ptr.vmem [resolvable:$true] %s150
      %156 = dma.hbm_to_vmem [thread:$0]  %s149, 8192, %s151, [#allocation18], 128, 128, 8
    $region49: #{tpu_custom_call.1} parent=1 // pred_fallthru
      _
    // Predicated region
    $region50: #{tpu_custom_call.1} parent=1 // pred_check
      _
    $region51: #{tpu_custom_call.1} parent=1 // pred_check_branch
      %158 = sbr.rel (0) target = $region53
    $region52: #{tpu_custom_call.1} parent=1 // pred_region
      %160 = dma.done [#allocation3], 512
    $region53: #{tpu_custom_call.1} parent=1 // pred_fallthru
      _
    // Predicated region
    $region54: #{tpu_custom_call.1} parent=1 // pred_check
      _
    $region55: #{tpu_custom_call.1} parent=1 // pred_check_branch
      %162 = sbr.rel (0) target = $region57
    $region56: #{tpu_custom_call.1} parent=1 // pred_region
      %164 = dma.done [#allocation6], 32
    $region57: #{tpu_custom_call.1} parent=1 // pred_fallthru
      _
    // Predicated region
    $region58: #{tpu_custom_call.1} parent=1 // pred_check
      _
    $region59: #{tpu_custom_call.1} parent=1 // pred_check_branch
      %166 = sbr.rel (0) target = $region61
    $region60: #{tpu_custom_call.1} parent=1 // pred_region
      %168 = dma.done [#allocation6], 8192
    $region61: #{tpu_custom_call.1} parent=1 // pred_fallthru
      _
    // Predicated region
    $region62: #{tpu_custom_call.1} parent=1 // pred_check
      _
    $region63: #{tpu_custom_call.1} parent=1 // pred_check_branch
      %170 = sbr.rel (0) target = $region65
    $region64: #{tpu_custom_call.1} parent=1 // pred_region
      %172 = dma.done [#allocation9], 64
    $region65: #{tpu_custom_call.1} parent=1 // pred_fallthru
      _
    // Predicated region
    $region66: #{tpu_custom_call.1} parent=1 // pred_check
      _
    $region67: #{tpu_custom_call.1} parent=1 // pred_check_branch
      %174 = sbr.rel (0) target = $region69
    $region68: #{tpu_custom_call.1} parent=1 // pred_region
      %176 = dma.done [#allocation9], 128
    $region69: #{tpu_custom_call.1} parent=1 // pred_fallthru
      _
    // Predicated region
    $region70: #{tpu_custom_call.1} parent=1 // pred_check
      _
    $region71: #{tpu_custom_call.1} parent=1 // pred_check_branch
      %178 = sbr.rel (0) target = $region73
    $region72: #{tpu_custom_call.1} parent=1 // pred_region
      %180 = dma.done [#allocation12], 128
    $region73: #{tpu_custom_call.1} parent=1 // pred_fallthru
      _
    // Predicated region
    $region74: #{tpu_custom_call.1} parent=1 // pred_check
      _
    $region75: #{tpu_custom_call.1} parent=1 // pred_check_branch
      %182 = sbr.rel (0) target = $region77
    $region76: #{tpu_custom_call.1} parent=1 // pred_region
      %184 = dma.done [#allocation12], 128
    $region77: #{tpu_custom_call.1} parent=1 // pred_fallthru
      _
    // Predicated region
    $region78: #{tpu_custom_call.1} parent=1 // pred_check
      _
    $region79: #{tpu_custom_call.1} parent=1 // pred_check_branch
      %186 = sbr.rel (0) target = $region81
    $region80: #{tpu_custom_call.1} parent=1 // pred_region
      %188 = dma.done [#allocation15], 128
    $region81: #{tpu_custom_call.1} parent=1 // pred_fallthru
      _
    // Predicated region
    $region82: #{tpu_custom_call.1} parent=1 // pred_check
      _
    $region83: #{tpu_custom_call.1} parent=1 // pred_check_branch
      %190 = sbr.rel (0) target = $region85
    $region84: #{tpu_custom_call.1} parent=1 // pred_region
      %192 = dma.done [#allocation15], 4096
    $region85: #{tpu_custom_call.1} parent=1 // pred_fallthru
      _
    // Predicated region
    $region86: #{tpu_custom_call.1} parent=1 // pred_check
      _
    $region87: #{tpu_custom_call.1} parent=1 // pred_check_branch
      %194 = sbr.rel (0) target = $region89
    $region88: #{tpu_custom_call.1} parent=1 // pred_region
      %196 = dma.done [#allocation18], 16384
    $region89: #{tpu_custom_call.1} parent=1 // pred_fallthru
      _
    // Predicated region
    $region90: #{tpu_custom_call.1} parent=1 // pred_check
      _
    $region91: #{tpu_custom_call.1} parent=1 // pred_check_branch
      %198 = sbr.rel (0) target = $region93
    $region92: #{tpu_custom_call.1} parent=1 // pred_region
      %200 = dma.done [#allocation18], 8192
    $region93: #{tpu_custom_call.1} parent=1 // pred_fallthru
      _
    %v202 = vld [vmem:[#allocation2] sm:$0xff]
    %v203 = vld [vmem:[#allocation2 + $0x8] sm:$0xff]
    %v204 = vld [vmem:[#allocation2 + $0x10] sm:$0xff]
    %v205 = vld [vmem:[#allocation2 + $0x18] sm:$0xff]
    %v206 = vmul.f32 %v202, %v202
    %v207 = vmul.f32 %v203, %v203
    %v208 = vmul.f32 %v204, %v204
    %v209 = vmul.f32 %v205, %v205
    %v210 = vadd.f32 %v206, %v207
    %211 = vadd.xlane.f32.xlu0 %v210
    %v212 = vpop.xlane.xlu0 %211
    %v213 = vadd.f32 %v208, %v209
    %214 = vadd.xlane.f32.xlu0 %v213
    %v215 = vpop.xlane.xlu0 %214
    %v216 = vrcp.pop 256.0
    %v217 = vmul.f32 256.0, %v216
    %v218 = vsub.f32 1.0, %v217
    %v219 = vmul.f32 %v216, %v218
    %v220 = vadd.f32 %v216, %v219
    %vm221 = vweird.f32 %v216
    %v222 = vsel %vm221, %v216, %v220
    %v223 = vmul.f32 %v212, %v222
    %v224 = vmul.f32 %v215, %v222
    %v225 = vadd.f32 %v223, 1e-06
    %v226 = vadd.f32 %v224, 1e-06
    %v227 = vrsqrt.pop %v225
    %v228 = vmul.f32 %v227, %v225
    %v229 = vmul.f32 %v228, %v227
    %v230 = vmul.f32 0.5, %v229
    %v231 = vsub.f32 1.5, %v230
    %v232 = vmul.f32 %v227, %v231
    %vm233 = vweird.f32 %v225
    %vm234 = vweird.f32 %v227
    %vm235 = vmor %vm233, %vm234
    %v236 = vsel %vm235, %v227, %v232
    %v237 = vrsqrt.pop %v226
    %v238 = vmul.f32 %v237, %v226
    %v239 = vmul.f32 %v238, %v237
    %v240 = vmul.f32 0.5, %v239
    %v241 = vsub.f32 1.5, %v240
    %v242 = vmul.f32 %v237, %v241
    %vm243 = vweird.f32 %v226
    %vm244 = vweird.f32 %v237
    %vm245 = vmor %vm243, %vm244
    %v246 = vsel %vm245, %v237, %v242
    %v247 = vmul.f32 %v202, %v236
    %v248 = vmul.f32 %v203, %v236
    %v249 = vmul.f32 %v204, %v246
    %v250 = vmul.f32 %v205, %v246
    %v251 = vld [vmem:[#allocation5] sm:$0x3]
    %v253 = vperm.slane %v251, 0
    %v254 = vperm.slane %v251, 1
    %v257 = vmul.f32 %v247, %v253
    %v258 = vmul.f32 %v248, %v254
    %v259 = vmul.f32 %v249, %v253
    %v260 = vmul.f32 %v250, %v254
    %v261 = vpack.c.bf16 %v259, %v257
    %v262 = vpack.c.bf16 %v260, %v258
    %v263 = vld [vmem:[#allocation7] sm:$0xff]
    %v264 = vld [vmem:[#allocation7 + $0x8] sm:$0xff]
    %v265 = vld [vmem:[#allocation7 + $0x10] sm:$0xff]
    %v266 = vld [vmem:[#allocation7 + $0x18] sm:$0xff]
    %v267 = vld [vmem:[#allocation7 + $0x20] sm:$0xff]
    %v268 = vld [vmem:[#allocation7 + $0x28] sm:$0xff]
    %v269 = vld [vmem:[#allocation7 + $0x30] sm:$0xff]
    %v270 = vld [vmem:[#allocation7 + $0x38] sm:$0xff]
    %v271 = vld [vmem:[#allocation7 + $0x40] sm:$0xff]
    %v272 = vld [vmem:[#allocation7 + $0x48] sm:$0xff]
    %v273 = vld [vmem:[#allocation7 + $0x50] sm:$0xff]
    %v274 = vld [vmem:[#allocation7 + $0x58] sm:$0xff]
    %v275 = vld [vmem:[#allocation7 + $0x60] sm:$0xff]
    %v276 = vld [vmem:[#allocation7 + $0x68] sm:$0xff]
    %v277 = vld [vmem:[#allocation7 + $0x70] sm:$0xff]
    %v278 = vld [vmem:[#allocation7 + $0x78] sm:$0xff]
    %v279 = vld [vmem:[#allocation7 + $0x80] sm:$0xff]
    %v280 = vld [vmem:[#allocation7 + $0x88] sm:$0xff]
    %v281 = vld [vmem:[#allocation7 + $0x90] sm:$0xff]
    %v282 = vld [vmem:[#allocation7 + $0x98] sm:$0xff]
    %v283 = vld [vmem:[#allocation7 + $0xa0] sm:$0xff]
    %v284 = vld [vmem:[#allocation7 + $0xa8] sm:$0xff]
    %v285 = vld [vmem:[#allocation7 + $0xb0] sm:$0xff]
    %v286 = vld [vmem:[#allocation7 + $0xb8] sm:$0xff]
    %v287 = vld [vmem:[#allocation7 + $0xc0] sm:$0xff]
    %v288 = vld [vmem:[#allocation7 + $0xc8] sm:$0xff]
    %v289 = vld [vmem:[#allocation7 + $0xd0] sm:$0xff]
    %v290 = vld [vmem:[#allocation7 + $0xd8] sm:$0xff]
    %v291 = vld [vmem:[#allocation7 + $0xe0] sm:$0xff]
    %v292 = vld [vmem:[#allocation7 + $0xe8] sm:$0xff]
    %v293 = vld [vmem:[#allocation7 + $0xf0] sm:$0xff]
    %v294 = vld [vmem:[#allocation7 + $0xf8] sm:$0xff]
    %v295 = vld [vmem:[#allocation7 + $0x100] sm:$0xff]
    %v296 = vld [vmem:[#allocation7 + $0x108] sm:$0xff]
    %v297 = vld [vmem:[#allocation7 + $0x110] sm:$0xff]
    %v298 = vld [vmem:[#allocation7 + $0x118] sm:$0xff]
    %v299 = vld [vmem:[#allocation7 + $0x120] sm:$0xff]
    %v300 = vld [vmem:[#allocation7 + $0x128] sm:$0xff]
    %v301 = vld [vmem:[#allocation7 + $0x130] sm:$0xff]
    %v302 = vld [vmem:[#allocation7 + $0x138] sm:$0xff]
    %v303 = vld [vmem:[#allocation7 + $0x140] sm:$0xff]
    %v304 = vld [vmem:[#allocation7 + $0x148] sm:$0xff]
    %v305 = vld [vmem:[#allocation7 + $0x150] sm:$0xff]
    %v306 = vld [vmem:[#allocation7 + $0x158] sm:$0xff]
    %v307 = vld [vmem:[#allocation7 + $0x160] sm:$0xff]
    %v308 = vld [vmem:[#allocation7 + $0x168] sm:$0xff]
    %v309 = vld [vmem:[#allocation7 + $0x170] sm:$0xff]
    %v310 = vld [vmem:[#allocation7 + $0x178] sm:$0xff]
    %v311 = vld [vmem:[#allocation7 + $0x180] sm:$0xff]
    %v312 = vld [vmem:[#allocation7 + $0x188] sm:$0xff]
    %v313 = vld [vmem:[#allocation7 + $0x190] sm:$0xff]
    %v314 = vld [vmem:[#allocation7 + $0x198] sm:$0xff]
    %v315 = vld [vmem:[#allocation7 + $0x1a0] sm:$0xff]
    %v316 = vld [vmem:[#allocation7 + $0x1a8] sm:$0xff]
    %v317 = vld [vmem:[#allocation7 + $0x1b0] sm:$0xff]
    %v318 = vld [vmem:[#allocation7 + $0x1b8] sm:$0xff]
    %v319 = vld [vmem:[#allocation7 + $0x1c0] sm:$0xff]
    %v320 = vld [vmem:[#allocation7 + $0x1c8] sm:$0xff]
    %v321 = vld [vmem:[#allocation7 + $0x1d0] sm:$0xff]
    %v322 = vld [vmem:[#allocation7 + $0x1d8] sm:$0xff]
    %v323 = vld [vmem:[#allocation7 + $0x1e0] sm:$0xff]
    %v324 = vld [vmem:[#allocation7 + $0x1e8] sm:$0xff]
    %v325 = vld [vmem:[#allocation7 + $0x1f0] sm:$0xff]
    %v326 = vld [vmem:[#allocation7 + $0x1f8] sm:$0xff]
    %v327 = vld [vmem:[#allocation8] sm:$0xf]
    %v329 = vperm.slane %v327, 0
    %v330 = vperm.slane %v327, 1
    %v331 = vperm.slane %v327, 2
    %v332 = vperm.slane %v327, 3
    %v401 = vunpack.c.l.b16 %v263
    %v402 = vunpack.c.h.b16 %v263
    %v403 = vunpack.c.l.b16 %v264
    %v404 = vunpack.c.h.b16 %v264
    %v405 = vunpack.c.l.b16 %v265
    %v406 = vunpack.c.h.b16 %v265
    %v407 = vunpack.c.l.b16 %v266
    %v408 = vunpack.c.h.b16 %v266
    %v409 = vunpack.c.l.b16 %v267
    %v410 = vunpack.c.h.b16 %v267
    %v411 = vunpack.c.l.b16 %v268
    %v412 = vunpack.c.h.b16 %v268
    %v413 = vunpack.c.l.b16 %v269
    %v414 = vunpack.c.h.b16 %v269
    %v415 = vunpack.c.l.b16 %v270
    %v416 = vunpack.c.h.b16 %v270
    %v417 = vunpack.c.l.b16 %v271
    %v418 = vunpack.c.h.b16 %v271
    %v419 = vunpack.c.l.b16 %v272
    %v420 = vunpack.c.h.b16 %v272
    %v421 = vunpack.c.l.b16 %v273
    %v422 = vunpack.c.h.b16 %v273
    %v423 = vunpack.c.l.b16 %v274
    %v424 = vunpack.c.h.b16 %v274
    %v425 = vunpack.c.l.b16 %v275
    %v426 = vunpack.c.h.b16 %v275
    %v427 = vunpack.c.l.b16 %v276
    %v428 = vunpack.c.h.b16 %v276
    %v429 = vunpack.c.l.b16 %v277
    %v430 = vunpack.c.h.b16 %v277
    %v431 = vunpack.c.l.b16 %v278
    %v432 = vunpack.c.h.b16 %v278
    %v433 = vunpack.c.l.b16 %v279
    %v434 = vunpack.c.h.b16 %v279
    %v435 = vunpack.c.l.b16 %v280
    %v436 = vunpack.c.h.b16 %v280
    %v437 = vunpack.c.l.b16 %v281
    %v438 = vunpack.c.h.b16 %v281
    %v439 = vunpack.c.l.b16 %v282
    %v440 = vunpack.c.h.b16 %v282
    %v441 = vunpack.c.l.b16 %v283
    %v442 = vunpack.c.h.b16 %v283
    %v443 = vunpack.c.l.b16 %v284
    %v444 = vunpack.c.h.b16 %v284
    %v445 = vunpack.c.l.b16 %v285
    %v446 = vunpack.c.h.b16 %v285
    %v447 = vunpack.c.l.b16 %v286
    %v448 = vunpack.c.h.b16 %v286
    %v449 = vunpack.c.l.b16 %v287
    %v450 = vunpack.c.h.b16 %v287
    %v451 = vunpack.c.l.b16 %v288
    %v452 = vunpack.c.h.b16 %v288
    %v453 = vunpack.c.l.b16 %v289
    %v454 = vunpack.c.h.b16 %v289
    %v455 = vunpack.c.l.b16 %v290
    %v456 = vunpack.c.h.b16 %v290
    %v457 = vunpack.c.l.b16 %v291
    %v458 = vunpack.c.h.b16 %v291
    %v459 = vunpack.c.l.b16 %v292
    %v460 = vunpack.c.h.b16 %v292
    %v461 = vunpack.c.l.b16 %v293
    %v462 = vunpack.c.h.b16 %v293
    %v463 = vunpack.c.l.b16 %v294
    %v464 = vunpack.c.h.b16 %v294
    %v465 = vunpack.c.l.b16 %v295
    %v466 = vunpack.c.h.b16 %v295
    %v467 = vunpack.c.l.b16 %v296
    %v468 = vunpack.c.h.b16 %v296
    %v469 = vunpack.c.l.b16 %v297
    %v470 = vunpack.c.h.b16 %v297
    %v471 = vunpack.c.l.b16 %v298
    %v472 = vunpack.c.h.b16 %v298
    %v473 = vunpack.c.l.b16 %v299
    %v474 = vunpack.c.h.b16 %v299
    %v475 = vunpack.c.l.b16 %v300
    %v476 = vunpack.c.h.b16 %v300
    %v477 = vunpack.c.l.b16 %v301
    %v478 = vunpack.c.h.b16 %v301
    %v479 = vunpack.c.l.b16 %v302
    %v480 = vunpack.c.h.b16 %v302
    %v481 = vunpack.c.l.b16 %v303
    %v482 = vunpack.c.h.b16 %v303
    %v483 = vunpack.c.l.b16 %v304
    %v484 = vunpack.c.h.b16 %v304
    %v485 = vunpack.c.l.b16 %v305
    %v486 = vunpack.c.h.b16 %v305
    %v487 = vunpack.c.l.b16 %v306
    %v488 = vunpack.c.h.b16 %v306
    %v489 = vunpack.c.l.b16 %v307
    %v490 = vunpack.c.h.b16 %v307
    %v491 = vunpack.c.l.b16 %v308
    %v492 = vunpack.c.h.b16 %v308
    %v493 = vunpack.c.l.b16 %v309
    %v494 = vunpack.c.h.b16 %v309
    %v495 = vunpack.c.l.b16 %v310
    %v496 = vunpack.c.h.b16 %v310
    %v497 = vunpack.c.l.b16 %v311
    %v498 = vunpack.c.h.b16 %v311
    %v499 = vunpack.c.l.b16 %v312
    %v500 = vunpack.c.h.b16 %v312
    %v501 = vunpack.c.l.b16 %v313
    %v502 = vunpack.c.h.b16 %v313
    %v503 = vunpack.c.l.b16 %v314
    %v504 = vunpack.c.h.b16 %v314
    %v505 = vunpack.c.l.b16 %v315
    %v506 = vunpack.c.h.b16 %v315
    %v507 = vunpack.c.l.b16 %v316
    %v508 = vunpack.c.h.b16 %v316
    %v509 = vunpack.c.l.b16 %v317
    %v510 = vunpack.c.h.b16 %v317
    %v511 = vunpack.c.l.b16 %v318
    %v512 = vunpack.c.h.b16 %v318
    %v513 = vunpack.c.l.b16 %v319
    %v514 = vunpack.c.h.b16 %v319
    %v515 = vunpack.c.l.b16 %v320
    %v516 = vunpack.c.h.b16 %v320
    %v517 = vunpack.c.l.b16 %v321
    %v518 = vunpack.c.h.b16 %v321
    %v519 = vunpack.c.l.b16 %v322
    %v520 = vunpack.c.h.b16 %v322
    %v521 = vunpack.c.l.b16 %v323
    %v522 = vunpack.c.h.b16 %v323
    %v523 = vunpack.c.l.b16 %v324
    %v524 = vunpack.c.h.b16 %v324
    %v525 = vunpack.c.l.b16 %v325
    %v526 = vunpack.c.h.b16 %v325
    %v527 = vunpack.c.l.b16 %v326
    %v528 = vunpack.c.h.b16 %v326
    %v529 = vpack.c.b16 %v405, %v401
    %v530 = vpack.c.b16 %v406, %v402
    %v531 = vpack.c.b16 %v407, %v403
    %v532 = vpack.c.b16 %v408, %v404
    %v533 = vpack.c.b16 %v413, %v409
    %v534 = vpack.c.b16 %v414, %v410
    %v535 = vpack.c.b16 %v415, %v411
    %v536 = vpack.c.b16 %v416, %v412
    %v537 = vpack.c.b16 %v421, %v417
    %v538 = vpack.c.b16 %v422, %v418
    %v539 = vpack.c.b16 %v423, %v419
    %v540 = vpack.c.b16 %v424, %v420
    %v541 = vpack.c.b16 %v429, %v425
    %v542 = vpack.c.b16 %v430, %v426
    %v543 = vpack.c.b16 %v431, %v427
    %v544 = vpack.c.b16 %v432, %v428
    %v545 = vpack.c.b16 %v437, %v433
    %v546 = vpack.c.b16 %v438, %v434
    %v547 = vpack.c.b16 %v439, %v435
    %v548 = vpack.c.b16 %v440, %v436
    %v549 = vpack.c.b16 %v445, %v441
    %v550 = vpack.c.b16 %v446, %v442
    %v551 = vpack.c.b16 %v447, %v443
    %v552 = vpack.c.b16 %v448, %v444
    %v553 = vpack.c.b16 %v453, %v449
    %v554 = vpack.c.b16 %v454, %v450
    %v555 = vpack.c.b16 %v455, %v451
    %v556 = vpack.c.b16 %v456, %v452
    %v557 = vpack.c.b16 %v461, %v457
    %v558 = vpack.c.b16 %v462, %v458
    %v559 = vpack.c.b16 %v463, %v459
    %v560 = vpack.c.b16 %v464, %v460
    %v561 = vpack.c.b16 %v469, %v465
    %v562 = vpack.c.b16 %v470, %v466
    %v563 = vpack.c.b16 %v471, %v467
    %v564 = vpack.c.b16 %v472, %v468
    %v565 = vpack.c.b16 %v477, %v473
    %v566 = vpack.c.b16 %v478, %v474
    %v567 = vpack.c.b16 %v479, %v475
    %v568 = vpack.c.b16 %v480, %v476
    %v569 = vpack.c.b16 %v485, %v481
    %v570 = vpack.c.b16 %v486, %v482
    %v571 = vpack.c.b16 %v487, %v483
    %v572 = vpack.c.b16 %v488, %v484
    %v573 = vpack.c.b16 %v493, %v489
    %v574 = vpack.c.b16 %v494, %v490
    %v575 = vpack.c.b16 %v495, %v491
    %v576 = vpack.c.b16 %v496, %v492
    %v577 = vpack.c.b16 %v501, %v497
    %v578 = vpack.c.b16 %v502, %v498
    %v579 = vpack.c.b16 %v503, %v499
    %v580 = vpack.c.b16 %v504, %v500
    %v581 = vpack.c.b16 %v509, %v505
    %v582 = vpack.c.b16 %v510, %v506
    %v583 = vpack.c.b16 %v511, %v507
    %v584 = vpack.c.b16 %v512, %v508
    %v585 = vpack.c.b16 %v517, %v513
    %v586 = vpack.c.b16 %v518, %v514
    %v587 = vpack.c.b16 %v519, %v515
    %v588 = vpack.c.b16 %v520, %v516
    %v589 = vpack.c.b16 %v525, %v521
    %v590 = vpack.c.b16 %v526, %v522
    %v591 = vpack.c.b16 %v527, %v523
    %v592 = vpack.c.b16 %v528, %v524
    %657 = vmatpush.bf16.msra.mxu0 %v557
    %658 = vmatpush.bf16.msra.mxu0 %v553
    %659 = vmatpush.bf16.msra.mxu0 %v549
    %660 = vmatpush.bf16.msra.mxu0 %v545
    %661 = vmatpush.bf16.msra.mxu0 %v541
    %662 = vmatpush.bf16.msra.mxu0 %v537
    %663 = vmatpush.bf16.msra.mxu0 %v533
    %664 = vmatpush.bf16.msra.mxu0 %v529
    %665 = vmatmul.bf16.gmra.mxu0 %v261
    %v666 = vpop.f32.mrf.mxu0
    %v667 = vadd.f32 %v329, %v666
    %v668 = vpop.f32.mrf.mxu0
    %v669 = vadd.f32 %v329, %v668
    %670 = vdwg.mxu0
    %671 = vmatpush.bf16.msra.mxu0 %v589
    %672 = vmatpush.bf16.msra.mxu0 %v585
    %673 = vmatpush.bf16.msra.mxu0 %v581
    %674 = vmatpush.bf16.msra.mxu0 %v577
    %675 = vmatpush.bf16.msra.mxu0 %v573
    %676 = vmatpush.bf16.msra.mxu0 %v569
    %677 = vmatpush.bf16.msra.mxu0 %v565
    %678 = vmatpush.bf16.msra.mxu0 %v561
    %679 = vmatmul.bf16.gmra.mxu0 %v262
    %v680 = vpop.f32.mrf.mxu0
    %v681 = vadd.f32 %v667, %v680
    %v682 = vpop.f32.mrf.mxu0
    %v683 = vadd.f32 %v669, %v682
    %684 = vdwg.mxu0
    %685 = vmatpush.bf16.msra.mxu0 %v558
    %686 = vmatpush.bf16.msra.mxu0 %v554
    %687 = vmatpush.bf16.msra.mxu0 %v550
    %688 = vmatpush.bf16.msra.mxu0 %v546
    %689 = vmatpush.bf16.msra.mxu0 %v542
    %690 = vmatpush.bf16.msra.mxu0 %v538
    %691 = vmatpush.bf16.msra.mxu0 %v534
    %692 = vmatpush.bf16.msra.mxu0 %v530
    %693 = vmatmul.bf16.gmra.mxu0 %v261
    %v694 = vpop.f32.mrf.mxu0
    %v695 = vadd.f32 %v330, %v694
    %v696 = vpop.f32.mrf.mxu0
    %v697 = vadd.f32 %v330, %v696
    %698 = vdwg.mxu0
    %699 = vmatpush.bf16.msra.mxu0 %v590
    %700 = vmatpush.bf16.msra.mxu0 %v586
    %701 = vmatpush.bf16.msra.mxu0 %v582
    %702 = vmatpush.bf16.msra.mxu0 %v578
    %703 = vmatpush.bf16.msra.mxu0 %v574
    %704 = vmatpush.bf16.msra.mxu0 %v570
    %705 = vmatpush.bf16.msra.mxu0 %v566
    %706 = vmatpush.bf16.msra.mxu0 %v562
    %707 = vmatmul.bf16.gmra.mxu0 %v262
    %v708 = vpop.f32.mrf.mxu0
    %v709 = vadd.f32 %v695, %v708
    %v710 = vpop.f32.mrf.mxu0
    %v711 = vadd.f32 %v697, %v710
    %712 = vdwg.mxu0
    %713 = vmatpush.bf16.msra.mxu0 %v559
    %714 = vmatpush.bf16.msra.mxu0 %v555
    %715 = vmatpush.bf16.msra.mxu0 %v551
    %716 = vmatpush.bf16.msra.mxu0 %v547
    %717 = vmatpush.bf16.msra.mxu0 %v543
    %718 = vmatpush.bf16.msra.mxu0 %v539
    %719 = vmatpush.bf16.msra.mxu0 %v535
    %720 = vmatpush.bf16.msra.mxu0 %v531
    %721 = vmatmul.bf16.gmra.mxu0 %v261
    %v722 = vpop.f32.mrf.mxu0
    %v723 = vadd.f32 %v331, %v722
    %v724 = vpop.f32.mrf.mxu0
    %v725 = vadd.f32 %v331, %v724
    %726 = vdwg.mxu0
    %727 = vmatpush.bf16.msra.mxu0 %v591
    %728 = vmatpush.bf16.msra.mxu0 %v587
    %729 = vmatpush.bf16.msra.mxu0 %v583
    %730 = vmatpush.bf16.msra.mxu0 %v579
    %731 = vmatpush.bf16.msra.mxu0 %v575
    %732 = vmatpush.bf16.msra.mxu0 %v571
    %733 = vmatpush.bf16.msra.mxu0 %v567
    %734 = vmatpush.bf16.msra.mxu0 %v563
    %735 = vmatmul.bf16.gmra.mxu0 %v262
    %v736 = vpop.f32.mrf.mxu0
    %v737 = vadd.f32 %v723, %v736
    %v738 = vpop.f32.mrf.mxu0
    %v739 = vadd.f32 %v725, %v738
    %740 = vdwg.mxu0
    %741 = vmatpush.bf16.msra.mxu0 %v560
    %742 = vmatpush.bf16.msra.mxu0 %v556
    %743 = vmatpush.bf16.msra.mxu0 %v552
    %744 = vmatpush.bf16.msra.mxu0 %v548
    %745 = vmatpush.bf16.msra.mxu0 %v544
    %746 = vmatpush.bf16.msra.mxu0 %v540
    %747 = vmatpush.bf16.msra.mxu0 %v536
    %748 = vmatpush.bf16.msra.mxu0 %v532
    %749 = vmatmul.bf16.gmra.mxu0 %v261
    %v750 = vpop.f32.mrf.mxu0
    %v751 = vadd.f32 %v332, %v750
    %v752 = vpop.f32.mrf.mxu0
    %v753 = vadd.f32 %v332, %v752
    %754 = vdwg.mxu0
    %755 = vmatpush.bf16.msra.mxu0 %v592
    %756 = vmatpush.bf16.msra.mxu0 %v588
    %757 = vmatpush.bf16.msra.mxu0 %v584
    %758 = vmatpush.bf16.msra.mxu0 %v580
    %759 = vmatpush.bf16.msra.mxu0 %v576
    %760 = vmatpush.bf16.msra.mxu0 %v572
    %761 = vmatpush.bf16.msra.mxu0 %v568
    %762 = vmatpush.bf16.msra.mxu0 %v564
    %763 = vmatmul.bf16.gmra.mxu0 %v262
    %v764 = vpop.f32.mrf.mxu0
    %v765 = vadd.f32 %v751, %v764
    %v766 = vpop.f32.mrf.mxu0
    %v767 = vadd.f32 %v753, %v766
    %768 = vdwg.mxu0
    %v769 = vld [vmem:[#allocation10] sm:$0xff]
    %v770 = vld [vmem:[#allocation11] sm:$0xff]
    %v771 = vld [vmem:[#allocation13] sm:$0xff]
    %v772 = vld [vmem:[#allocation14] sm:$0xff]
    %v773 = vlaneseq
    %v774 = vand.u32 %v773, 127
    %v775 = vlaneseq
    %v776 = vshrl.u32 %v775, 7
    %vm777 = vcmp.le.s32.totalorder %v774, %v776
    %v778 = vmul.f32 %v737, %v771
    %v779 = vmul.f32 %v739, %v771
    %780 = vrot.lane.b32.xlu0 %v737, 64
    %v781 = vpop.permute.xlu0 %780
    %782 = vrot.lane.b32.xlu0 %v739, 64
    %v783 = vpop.permute.xlu0 %782
    %v784 = vmul.f32 %v781, %v772
    %v785 = vmul.f32 %v783, %v772
    %v786 = vadd.f32 %v778, %v784
    %v787 = vadd.f32 %v779, %v785
    %v788 = vpack.c.bf16 %v786, %v786
    %v789 = vpack.c.bf16 %v787, %v787
    %v790 = vpack.c.bf16 %v765, %v765
    %v791 = vpack.c.bf16 %v767, %v767
    %v792 = vmul.f32 %v681, %v769
    %v793 = vmul.f32 %v683, %v769
    %794 = vrot.lane.b32.xlu0 %v681, 64
    %v795 = vpop.permute.xlu0 %794
    %796 = vrot.lane.b32.xlu0 %v683, 64
    %v797 = vpop.permute.xlu0 %796
    %v798 = vmul.f32 %v795, %v770
    %v799 = vmul.f32 %v797, %v770
    %v800 = vadd.f32 %v792, %v798
    %v801 = vadd.f32 %v793, %v799
    %v802 = vmul.f32 %v709, %v769
    %v803 = vmul.f32 %v711, %v769
    %804 = vrot.lane.b32.xlu0 %v709, 64
    %v805 = vpop.permute.xlu0 %804
    %806 = vrot.lane.b32.xlu0 %v711, 64
    %v807 = vpop.permute.xlu0 %806
    %v808 = vmul.f32 %v805, %v770
    %v809 = vmul.f32 %v807, %v770
    %v810 = vadd.f32 %v802, %v808
    %v811 = vadd.f32 %v803, %v809
    %v812 = vpack.c.bf16 %v800, %v800
    %v813 = vpack.c.bf16 %v810, %v810
    %v814 = vpack.c.bf16 %v801, %v801
    %v815 = vpack.c.bf16 %v811, %v811
    %v818 = vunpack.c.l.b16 %v812
    %v819 = vunpack.c.l.b16 %v813
    %v820 = vpack.c.b16 %v819, %v818
    %822 = vmatpush.bf16.xpose.msra.mxu0 0
    %823 = vmatpush.bf16.xpose.msra.mxu0 0
    %824 = vmatpush.bf16.xpose.msra.mxu0 0
    %825 = vmatpush.bf16.xpose.msra.mxu0 0
    %826 = vmatpush.bf16.xpose.msra.mxu0 0
    %827 = vmatpush.bf16.xpose.msra.mxu0 0
    %828 = vmatpush.bf16.xpose.msra.mxu0 0
    %829 = vmatpush.bf16.xpose.msra.mxu0 %v788
    %830 = vmatmul.bf16.gmra.mxu0 %v820
    %v831 = vpop.f32.mrf.mxu0
    %v832 = vadd.f32 0.0, %v831
    %v833 = vpop.f32.mrf.mxu0
    %v834 = vadd.f32 0.0, %v833
    %835 = vdwg.mxu0
    %v838 = vunpack.c.l.b16 %v814
    %v839 = vunpack.c.l.b16 %v815
    %v840 = vpack.c.b16 %v839, %v838
    %842 = vmatpush.bf16.xpose.msra.mxu0 0
    %843 = vmatpush.bf16.xpose.msra.mxu0 0
    %844 = vmatpush.bf16.xpose.msra.mxu0 0
    %845 = vmatpush.bf16.xpose.msra.mxu0 0
    %846 = vmatpush.bf16.xpose.msra.mxu0 0
    %847 = vmatpush.bf16.xpose.msra.mxu0 0
    %848 = vmatpush.bf16.xpose.msra.mxu0 0
    %849 = vmatpush.bf16.xpose.msra.mxu0 %v789
    %850 = vmatmul.bf16.gmra.mxu0 %v840
    %v851 = vpop.f32.mrf.mxu0
    %v852 = vadd.f32 0.0, %v851
    %v853 = vpop.f32.mrf.mxu0
    %v854 = vadd.f32 0.0, %v853
    %855 = vdwg.mxu0
    %v856 = vsel %vm777, 1, 0
    %vm857 = vcmp.eq.s32.totalorder %v856, 1
    %v858 = vsel %vm857, %v832, -1e+30
    %v859 = vsel %vm857, %v834, -1e+30
    %v860 = vsel %vm857, %v852, -1e+30
    %v861 = vsel %vm857, %v854, -1e+30
    %vm862 = vcmask 64512
    %v863 = vsel %vm862, %v858, -inf
    %864 = vmax.xlane.f32.xlu0 %v863
    %v865 = vpop.xlane.xlu0 %864
    %v866 = vsel %vm862, %v859, -inf
    %867 = vmax.xlane.f32.xlu0 %v866
    %v868 = vpop.xlane.xlu0 %867
    %v869 = vsel %vm862, %v860, -inf
    %870 = vmax.xlane.f32.xlu0 %v869
    %v871 = vpop.xlane.xlu0 %870
    %v872 = vsel %vm862, %v861, -inf
    %873 = vmax.xlane.f32.xlu0 %v872
    %v874 = vpop.xlane.xlu0 %873
    %v875 = vsub.f32 %v858, %v865
    %v876 = vsub.f32 %v859, %v868
    %v877 = vsub.f32 %v860, %v871
    %v878 = vsub.f32 %v861, %v874
    %v879 = vmul.f32 %v875, 1.442695
    %v880 = vpow.pop %v879
    %v881 = vmul.f32 %v876, 1.442695
    %v882 = vpow.pop %v881
    %v883 = vmul.f32 %v877, 1.442695
    %v884 = vpow.pop %v883
    %v885 = vmul.f32 %v878, 1.442695
    %v886 = vpow.pop %v885
    %v887 = vsel %vm862, %v880, 0.0
    %888 = vadd.xlane.f32.xlu0 %v887
    %v889 = vpop.xlane.xlu0 %888
    %v890 = vsel %vm862, %v882, 0.0
    %891 = vadd.xlane.f32.xlu0 %v890
    %v892 = vpop.xlane.xlu0 %891
    %v893 = vsel %vm862, %v884, 0.0
    %894 = vadd.xlane.f32.xlu0 %v893
    %v895 = vpop.xlane.xlu0 %894
    %v896 = vsel %vm862, %v886, 0.0
    %897 = vadd.xlane.f32.xlu0 %v896
    %v898 = vpop.xlane.xlu0 %897
    %v899 = vpack.c.bf16 %v880, %v880
    %v900 = vpack.c.bf16 %v882, %v882
    %v901 = vpack.c.bf16 %v884, %v884
    %v902 = vpack.c.bf16 %v886, %v886
    %v905 = vunpack.c.l.b16 %v899
    %v906 = vunpack.c.l.b16 %v900
    %v907 = vpack.c.b16 %v906, %v905
    %v909 = vsel %vm862, %v907, 0
    %vm911 = vcmask 1043456
    %v913 = vsel %vm911, %v790, 0
    %915 = vmatpush.bf16.msra.mxu0 0
    %916 = vmatpush.bf16.msra.mxu0 0
    %917 = vmatpush.bf16.msra.mxu0 0
    %918 = vmatpush.bf16.msra.mxu0 0
    %919 = vmatpush.bf16.msra.mxu0 0
    %920 = vmatpush.bf16.msra.mxu0 0
    %921 = vmatpush.bf16.msra.mxu0 0
    %922 = vmatpush.bf16.msra.mxu0 %v913
    %923 = vmatmul.bf16.gmra.mxu0 %v909
    %v924 = vpop.f32.mrf.mxu0
    %v925 = vadd.f32 0.0, %v924
    %v926 = vpop.f32.mrf.mxu0
    %v927 = vadd.f32 0.0, %v926
    %928 = vdwg.mxu0
    %v931 = vunpack.c.l.b16 %v901
    %v932 = vunpack.c.l.b16 %v902
    %v933 = vpack.c.b16 %v932, %v931
    %v935 = vsel %vm862, %v933, 0
    %v938 = vsel %vm911, %v791, 0
    %940 = vmatpush.bf16.msra.mxu0 0
    %941 = vmatpush.bf16.msra.mxu0 0
    %942 = vmatpush.bf16.msra.mxu0 0
    %943 = vmatpush.bf16.msra.mxu0 0
    %944 = vmatpush.bf16.msra.mxu0 0
    %945 = vmatpush.bf16.msra.mxu0 0
    %946 = vmatpush.bf16.msra.mxu0 0
    %947 = vmatpush.bf16.msra.mxu0 %v938
    %948 = vmatmul.bf16.gmra.mxu0 %v935
    %v949 = vpop.f32.mrf.mxu0
    %v950 = vadd.f32 0.0, %v949
    %v951 = vpop.f32.mrf.mxu0
    %v952 = vadd.f32 0.0, %v951
    %953 = vdwg.mxu0
    %v954 = vrcp.pop %v889
    %v955 = vrcp.pop %v892
    %v956 = vrcp.pop %v895
    %v957 = vrcp.pop %v898
    %v958 = vmul.f32 %v925, %v954
    %v959 = vmul.f32 %v927, %v955
    %v960 = vmul.f32 %v950, %v956
    %v961 = vmul.f32 %v952, %v957
    %v962 = vpack.c.bf16 %v960, %v958
    %v963 = vpack.c.bf16 %v961, %v959
    %v964 = vld [vmem:[#allocation16] sm:$0xff]
    %v965 = vld [vmem:[#allocation16 + $0x8] sm:$0xff]
    %v966 = vld [vmem:[#allocation16 + $0x10] sm:$0xff]
    %v967 = vld [vmem:[#allocation16 + $0x18] sm:$0xff]
    %v968 = vld [vmem:[#allocation16 + $0x20] sm:$0xff]
    %v969 = vld [vmem:[#allocation16 + $0x28] sm:$0xff]
    %v970 = vld [vmem:[#allocation16 + $0x30] sm:$0xff]
    %v971 = vld [vmem:[#allocation16 + $0x38] sm:$0xff]
    %v972 = vld [vmem:[#allocation16 + $0x40] sm:$0xff]
    %v973 = vld [vmem:[#allocation16 + $0x48] sm:$0xff]
    %v974 = vld [vmem:[#allocation16 + $0x50] sm:$0xff]
    %v975 = vld [vmem:[#allocation16 + $0x58] sm:$0xff]
    %v976 = vld [vmem:[#allocation16 + $0x60] sm:$0xff]
    %v977 = vld [vmem:[#allocation16 + $0x68] sm:$0xff]
    %v978 = vld [vmem:[#allocation16 + $0x70] sm:$0xff]
    %v979 = vld [vmem:[#allocation16 + $0x78] sm:$0xff]
    %v980 = vld [vmem:[#allocation16 + $0x80] sm:$0xff]
    %v981 = vld [vmem:[#allocation16 + $0x88] sm:$0xff]
    %v982 = vld [vmem:[#allocation16 + $0x90] sm:$0xff]
    %v983 = vld [vmem:[#allocation16 + $0x98] sm:$0xff]
    %v984 = vld [vmem:[#allocation16 + $0xa0] sm:$0xff]
    %v985 = vld [vmem:[#allocation16 + $0xa8] sm:$0xff]
    %v986 = vld [vmem:[#allocation16 + $0xb0] sm:$0xff]
    %v987 = vld [vmem:[#allocation16 + $0xb8] sm:$0xff]
    %v988 = vld [vmem:[#allocation16 + $0xc0] sm:$0xff]
    %v989 = vld [vmem:[#allocation16 + $0xc8] sm:$0xff]
    %v990 = vld [vmem:[#allocation16 + $0xd0] sm:$0xff]
    %v991 = vld [vmem:[#allocation16 + $0xd8] sm:$0xff]
    %v992 = vld [vmem:[#allocation16 + $0xe0] sm:$0xff]
    %v993 = vld [vmem:[#allocation16 + $0xe8] sm:$0xff]
    %v994 = vld [vmem:[#allocation16 + $0xf0] sm:$0xff]
    %v995 = vld [vmem:[#allocation16 + $0xf8] sm:$0xff]
    %v1028 = vunpack.c.l.b16 %v964
    %v1029 = vunpack.c.h.b16 %v964
    %v1030 = vunpack.c.l.b16 %v965
    %v1031 = vunpack.c.h.b16 %v965
    %v1032 = vunpack.c.l.b16 %v966
    %v1033 = vunpack.c.h.b16 %v966
    %v1034 = vunpack.c.l.b16 %v967
    %v1035 = vunpack.c.h.b16 %v967
    %v1036 = vunpack.c.l.b16 %v968
    %v1037 = vunpack.c.h.b16 %v968
    %v1038 = vunpack.c.l.b16 %v969
    %v1039 = vunpack.c.h.b16 %v969
    %v1040 = vunpack.c.l.b16 %v970
    %v1041 = vunpack.c.h.b16 %v970
    %v1042 = vunpack.c.l.b16 %v971
    %v1043 = vunpack.c.h.b16 %v971
    %v1044 = vunpack.c.l.b16 %v972
    %v1045 = vunpack.c.h.b16 %v972
    %v1046 = vunpack.c.l.b16 %v973
    %v1047 = vunpack.c.h.b16 %v973
    %v1048 = vunpack.c.l.b16 %v974
    %v1049 = vunpack.c.h.b16 %v974
    %v1050 = vunpack.c.l.b16 %v975
    %v1051 = vunpack.c.h.b16 %v975
    %v1052 = vunpack.c.l.b16 %v976
    %v1053 = vunpack.c.h.b16 %v976
    %v1054 = vunpack.c.l.b16 %v977
    %v1055 = vunpack.c.h.b16 %v977
    %v1056 = vunpack.c.l.b16 %v978
    %v1057 = vunpack.c.h.b16 %v978
    %v1058 = vunpack.c.l.b16 %v979
    %v1059 = vunpack.c.h.b16 %v979
    %v1060 = vunpack.c.l.b16 %v980
    %v1061 = vunpack.c.h.b16 %v980
    %v1062 = vunpack.c.l.b16 %v981
    %v1063 = vunpack.c.h.b16 %v981
    %v1064 = vunpack.c.l.b16 %v982
    %v1065 = vunpack.c.h.b16 %v982
    %v1066 = vunpack.c.l.b16 %v983
    %v1067 = vunpack.c.h.b16 %v983
    %v1068 = vunpack.c.l.b16 %v984
    %v1069 = vunpack.c.h.b16 %v984
    %v1070 = vunpack.c.l.b16 %v985
    %v1071 = vunpack.c.h.b16 %v985
    %v1072 = vunpack.c.l.b16 %v986
    %v1073 = vunpack.c.h.b16 %v986
    %v1074 = vunpack.c.l.b16 %v987
    %v1075 = vunpack.c.h.b16 %v987
    %v1076 = vunpack.c.l.b16 %v988
    %v1077 = vunpack.c.h.b16 %v988
    %v1078 = vunpack.c.l.b16 %v989
    %v1079 = vunpack.c.h.b16 %v989
    %v1080 = vunpack.c.l.b16 %v990
    %v1081 = vunpack.c.h.b16 %v990
    %v1082 = vunpack.c.l.b16 %v991
    %v1083 = vunpack.c.h.b16 %v991
    %v1084 = vunpack.c.l.b16 %v992
    %v1085 = vunpack.c.h.b16 %v992
    %v1086 = vunpack.c.l.b16 %v993
    %v1087 = vunpack.c.h.b16 %v993
    %v1088 = vunpack.c.l.b16 %v994
    %v1089 = vunpack.c.h.b16 %v994
    %v1090 = vunpack.c.l.b16 %v995
    %v1091 = vunpack.c.h.b16 %v995
    %v1092 = vpack.c.b16 %v1030, %v1028
    %v1093 = vpack.c.b16 %v1031, %v1029
    %v1094 = vpack.c.b16 %v1034, %v1032
    %v1095 = vpack.c.b16 %v1035, %v1033
    %v1096 = vpack.c.b16 %v1038, %v1036
    %v1097 = vpack.c.b16 %v1039, %v1037
    %v1098 = vpack.c.b16 %v1042, %v1040
    %v1099 = vpack.c.b16 %v1043, %v1041
    %v1100 = vpack.c.b16 %v1046, %v1044
    %v1101 = vpack.c.b16 %v1047, %v1045
    %v1102 = vpack.c.b16 %v1050, %v1048
    %v1103 = vpack.c.b16 %v1051, %v1049
    %v1104 = vpack.c.b16 %v1054, %v1052
    %v1105 = vpack.c.b16 %v1055, %v1053
    %v1106 = vpack.c.b16 %v1058, %v1056
    %v1107 = vpack.c.b16 %v1059, %v1057
    %v1108 = vpack.c.b16 %v1062, %v1060
    %v1109 = vpack.c.b16 %v1063, %v1061
    %v1110 = vpack.c.b16 %v1066, %v1064
    %v1111 = vpack.c.b16 %v1067, %v1065
    %v1112 = vpack.c.b16 %v1070, %v1068
    %v1113 = vpack.c.b16 %v1071, %v1069
    %v1114 = vpack.c.b16 %v1074, %v1072
    %v1115 = vpack.c.b16 %v1075, %v1073
    %v1116 = vpack.c.b16 %v1078, %v1076
    %v1117 = vpack.c.b16 %v1079, %v1077
    %v1118 = vpack.c.b16 %v1082, %v1080
    %v1119 = vpack.c.b16 %v1083, %v1081
    %v1120 = vpack.c.b16 %v1086, %v1084
    %v1121 = vpack.c.b16 %v1087, %v1085
    %v1122 = vpack.c.b16 %v1090, %v1088
    %v1123 = vpack.c.b16 %v1091, %v1089
    %1156 = vmatpush.bf16.msra.mxu0 %v1106
    %1157 = vmatpush.bf16.msra.mxu0 %v1104
    %1158 = vmatpush.bf16.msra.mxu0 %v1102
    %1159 = vmatpush.bf16.msra.mxu0 %v1100
    %1160 = vmatpush.bf16.msra.mxu0 %v1098
    %1161 = vmatpush.bf16.msra.mxu0 %v1096
    %1162 = vmatpush.bf16.msra.mxu0 %v1094
    %1163 = vmatpush.bf16.msra.mxu0 %v1092
    %1164 = vmatmul.bf16.gmra.mxu0 %v962
    %v1165 = vpop.f32.mrf.mxu0
    %v1166 = vadd.f32 %v202, %v1165
    %v1167 = vpop.f32.mrf.mxu0
    %v1168 = vadd.f32 %v204, %v1167
    %1169 = vdwg.mxu0
    %1170 = vmatpush.bf16.msra.mxu0 %v1122
    %1171 = vmatpush.bf16.msra.mxu0 %v1120
    %1172 = vmatpush.bf16.msra.mxu0 %v1118
    %1173 = vmatpush.bf16.msra.mxu0 %v1116
    %1174 = vmatpush.bf16.msra.mxu0 %v1114
    %1175 = vmatpush.bf16.msra.mxu0 %v1112
    %1176 = vmatpush.bf16.msra.mxu0 %v1110
    %1177 = vmatpush.bf16.msra.mxu0 %v1108
    %1178 = vmatmul.bf16.gmra.mxu0 %v963
    %v1179 = vpop.f32.mrf.mxu0
    %v1180 = vadd.f32 %v1166, %v1179
    %v1181 = vpop.f32.mrf.mxu0
    %v1182 = vadd.f32 %v1168, %v1181
    %1183 = vdwg.mxu0
    %1184 = vmatpush.bf16.msra.mxu0 %v1107
    %1185 = vmatpush.bf16.msra.mxu0 %v1105
    %1186 = vmatpush.bf16.msra.mxu0 %v1103
    %1187 = vmatpush.bf16.msra.mxu0 %v1101
    %1188 = vmatpush.bf16.msra.mxu0 %v1099
    %1189 = vmatpush.bf16.msra.mxu0 %v1097
    %1190 = vmatpush.bf16.msra.mxu0 %v1095
    %1191 = vmatpush.bf16.msra.mxu0 %v1093
    %1192 = vmatmul.bf16.gmra.mxu0 %v962
    %v1193 = vpop.f32.mrf.mxu0
    %v1194 = vadd.f32 %v203, %v1193
    %v1195 = vpop.f32.mrf.mxu0
    %v1196 = vadd.f32 %v205, %v1195
    %1197 = vdwg.mxu0
    %1198 = vmatpush.bf16.msra.mxu0 %v1123
    %1199 = vmatpush.bf16.msra.mxu0 %v1121
    %1200 = vmatpush.bf16.msra.mxu0 %v1119
    %1201 = vmatpush.bf16.msra.mxu0 %v1117
    %1202 = vmatpush.bf16.msra.mxu0 %v1115
    %1203 = vmatpush.bf16.msra.mxu0 %v1113
    %1204 = vmatpush.bf16.msra.mxu0 %v1111
    %1205 = vmatpush.bf16.msra.mxu0 %v1109
    %1206 = vmatmul.bf16.gmra.mxu0 %v963
    %v1207 = vpop.f32.mrf.mxu0
    %v1208 = vadd.f32 %v1194, %v1207
    %v1209 = vpop.f32.mrf.mxu0
    %v1210 = vadd.f32 %v1196, %v1209
    %1211 = vdwg.mxu0
    %v1212 = vmul.f32 %v1180, %v1180
    %v1213 = vmul.f32 %v1208, %v1208
    %v1214 = vmul.f32 %v1182, %v1182
    %v1215 = vmul.f32 %v1210, %v1210
    %v1216 = vadd.f32 %v1212, %v1213
    %1217 = vadd.xlane.f32.xlu0 %v1216
    %v1218 = vpop.xlane.xlu0 %1217
    %v1219 = vadd.f32 %v1214, %v1215
    %1220 = vadd.xlane.f32.xlu0 %v1219
    %v1221 = vpop.xlane.xlu0 %1220
    %v1222 = vmul.f32 %v1218, %v222
    %v1223 = vmul.f32 %v1221, %v222
    %v1224 = vadd.f32 %v1222, 1e-06
    %v1225 = vadd.f32 %v1223, 1e-06
    %v1226 = vrsqrt.pop %v1224
    %v1227 = vmul.f32 %v1226, %v1224
    %v1228 = vmul.f32 %v1227, %v1226
    %v1229 = vmul.f32 0.5, %v1228
    %v1230 = vsub.f32 1.5, %v1229
    %v1231 = vmul.f32 %v1226, %v1230
    %vm1232 = vweird.f32 %v1224
    %vm1233 = vweird.f32 %v1226
    %vm1234 = vmor %vm1232, %vm1233
    %v1235 = vsel %vm1234, %v1226, %v1231
    %v1236 = vrsqrt.pop %v1225
    %v1237 = vmul.f32 %v1236, %v1225
    %v1238 = vmul.f32 %v1237, %v1236
    %v1239 = vmul.f32 0.5, %v1238
    %v1240 = vsub.f32 1.5, %v1239
    %v1241 = vmul.f32 %v1236, %v1240
    %vm1242 = vweird.f32 %v1225
    %vm1243 = vweird.f32 %v1236
    %vm1244 = vmor %vm1242, %vm1243
    %v1245 = vsel %vm1244, %v1236, %v1241
    %v1246 = vmul.f32 %v1180, %v1235
    %v1247 = vmul.f32 %v1208, %v1235
    %v1248 = vmul.f32 %v1182, %v1245
    %v1249 = vmul.f32 %v1210, %v1245
    %v1250 = vld [vmem:[%s9] sm:$0x3]
    %v1252 = vperm.slane %v1250, 0
    %v1253 = vperm.slane %v1250, 1
    %v1256 = vmul.f32 %v1246, %v1252
    %v1257 = vmul.f32 %v1247, %v1253
    %v1258 = vmul.f32 %v1248, %v1252
    %v1259 = vmul.f32 %v1249, %v1253
    %v1260 = vpack.c.bf16 %v1258, %v1256
    %v1261 = vpack.c.bf16 %v1259, %v1257
    %v1262 = vld [vmem:[#allocation17] sm:$0xff]
    %v1263 = vld [vmem:[#allocation17 + $0x8] sm:$0xff]
    %v1264 = vld [vmem:[#allocation17 + $0x10] sm:$0xff]
    %v1265 = vld [vmem:[#allocation17 + $0x18] sm:$0xff]
    %v1266 = vld [vmem:[#allocation17 + $0x20] sm:$0xff]
    %v1267 = vld [vmem:[#allocation17 + $0x28] sm:$0xff]
    %v1268 = vld [vmem:[#allocation17 + $0x30] sm:$0xff]
    %v1269 = vld [vmem:[#allocation17 + $0x38] sm:$0xff]
    %v1270 = vld [vmem:[#allocation17 + $0x40] sm:$0xff]
    %v1271 = vld [vmem:[#allocation17 + $0x48] sm:$0xff]
    %v1272 = vld [vmem:[#allocation17 + $0x50] sm:$0xff]
    %v1273 = vld [vmem:[#allocation17 + $0x58] sm:$0xff]
    %v1274 = vld [vmem:[#allocation17 + $0x60] sm:$0xff]
    %v1275 = vld [vmem:[#allocation17 + $0x68] sm:$0xff]
    %v1276 = vld [vmem:[#allocation17 + $0x70] sm:$0xff]
    %v1277 = vld [vmem:[#allocation17 + $0x78] sm:$0xff]
    %v1278 = vld [vmem:[#allocation17 + $0x80] sm:$0xff]
    %v1279 = vld [vmem:[#allocation17 + $0x88] sm:$0xff]
    %v1280 = vld [vmem:[#allocation17 + $0x90] sm:$0xff]
    %v1281 = vld [vmem:[#allocation17 + $0x98] sm:$0xff]
    %v1282 = vld [vmem:[#allocation17 + $0xa0] sm:$0xff]
    %v1283 = vld [vmem:[#allocation17 + $0xa8] sm:$0xff]
    %v1284 = vld [vmem:[#allocation17 + $0xb0] sm:$0xff]
    %v1285 = vld [vmem:[#allocation17 + $0xb8] sm:$0xff]
    %v1286 = vld [vmem:[#allocation17 + $0xc0] sm:$0xff]
    %v1287 = vld [vmem:[#allocation17 + $0xc8] sm:$0xff]
    %v1288 = vld [vmem:[#allocation17 + $0xd0] sm:$0xff]
    %v1289 = vld [vmem:[#allocation17 + $0xd8] sm:$0xff]
    %v1290 = vld [vmem:[#allocation17 + $0xe0] sm:$0xff]
    %v1291 = vld [vmem:[#allocation17 + $0xe8] sm:$0xff]
    %v1292 = vld [vmem:[#allocation17 + $0xf0] sm:$0xff]
    %v1293 = vld [vmem:[#allocation17 + $0xf8] sm:$0xff]
    %v1294 = vld [vmem:[#allocation17 + $0x100] sm:$0xff]
    %v1295 = vld [vmem:[#allocation17 + $0x108] sm:$0xff]
    %v1296 = vld [vmem:[#allocation17 + $0x110] sm:$0xff]
    %v1297 = vld [vmem:[#allocation17 + $0x118] sm:$0xff]
    %v1298 = vld [vmem:[#allocation17 + $0x120] sm:$0xff]
    %v1299 = vld [vmem:[#allocation17 + $0x128] sm:$0xff]
    %v1300 = vld [vmem:[#allocation17 + $0x130] sm:$0xff]
    %v1301 = vld [vmem:[#allocation17 + $0x138] sm:$0xff]
    %v1302 = vld [vmem:[#allocation17 + $0x140] sm:$0xff]
    %v1303 = vld [vmem:[#allocation17 + $0x148] sm:$0xff]
    %v1304 = vld [vmem:[#allocation17 + $0x150] sm:$0xff]
    %v1305 = vld [vmem:[#allocation17 + $0x158] sm:$0xff]
    %v1306 = vld [vmem:[#allocation17 + $0x160] sm:$0xff]
    %v1307 = vld [vmem:[#allocation17 + $0x168] sm:$0xff]
    %v1308 = vld [vmem:[#allocation17 + $0x170] sm:$0xff]
    %v1309 = vld [vmem:[#allocation17 + $0x178] sm:$0xff]
    %v1310 = vld [vmem:[#allocation17 + $0x180] sm:$0xff]
    %v1311 = vld [vmem:[#allocation17 + $0x188] sm:$0xff]
    %v1312 = vld [vmem:[#allocation17 + $0x190] sm:$0xff]
    %v1313 = vld [vmem:[#allocation17 + $0x198] sm:$0xff]
    %v1314 = vld [vmem:[#allocation17 + $0x1a0] sm:$0xff]
    %v1315 = vld [vmem:[#allocation17 + $0x1a8] sm:$0xff]
    %v1316 = vld [vmem:[#allocation17 + $0x1b0] sm:$0xff]
    %v1317 = vld [vmem:[#allocation17 + $0x1b8] sm:$0xff]
    %v1318 = vld [vmem:[#allocation17 + $0x1c0] sm:$0xff]
    %v1319 = vld [vmem:[#allocation17 + $0x1c8] sm:$0xff]
    %v1320 = vld [vmem:[#allocation17 + $0x1d0] sm:$0xff]
    %v1321 = vld [vmem:[#allocation17 + $0x1d8] sm:$0xff]
    %v1322 = vld [vmem:[#allocation17 + $0x1e0] sm:$0xff]
    %v1323 = vld [vmem:[#allocation17 + $0x1e8] sm:$0xff]
    %v1324 = vld [vmem:[#allocation17 + $0x1f0] sm:$0xff]
    %v1325 = vld [vmem:[#allocation17 + $0x1f8] sm:$0xff]
    %v1326 = vld [vmem:[#allocation17 + $0x200] sm:$0xff]
    %v1327 = vld [vmem:[#allocation17 + $0x208] sm:$0xff]
    %v1328 = vld [vmem:[#allocation17 + $0x210] sm:$0xff]
    %v1329 = vld [vmem:[#allocation17 + $0x218] sm:$0xff]
    %v1330 = vld [vmem:[#allocation17 + $0x220] sm:$0xff]
    %v1331 = vld [vmem:[#allocation17 + $0x228] sm:$0xff]
    %v1332 = vld [vmem:[#allocation17 + $0x230] sm:$0xff]
    %v1333 = vld [vmem:[#allocation17 + $0x238] sm:$0xff]
    %v1334 = vld [vmem:[#allocation17 + $0x240] sm:$0xff]
    %v1335 = vld [vmem:[#allocation17 + $0x248] sm:$0xff]
    %v1336 = vld [vmem:[#allocation17 + $0x250] sm:$0xff]
    %v1337 = vld [vmem:[#allocation17 + $0x258] sm:$0xff]
    %v1338 = vld [vmem:[#allocation17 + $0x260] sm:$0xff]
    %v1339 = vld [vmem:[#allocation17 + $0x268] sm:$0xff]
    %v1340 = vld [vmem:[#allocation17 + $0x270] sm:$0xff]
    %v1341 = vld [vmem:[#allocation17 + $0x278] sm:$0xff]
    %v1342 = vld [vmem:[#allocation17 + $0x280] sm:$0xff]
    %v1343 = vld [vmem:[#allocation17 + $0x288] sm:$0xff]
    %v1344 = vld [vmem:[#allocation17 + $0x290] sm:$0xff]
    %v1345 = vld [vmem:[#allocation17 + $0x298] sm:$0xff]
    %v1346 = vld [vmem:[#allocation17 + $0x2a0] sm:$0xff]
    %v1347 = vld [vmem:[#allocation17 + $0x2a8] sm:$0xff]
    %v1348 = vld [vmem:[#allocation17 + $0x2b0] sm:$0xff]
    %v1349 = vld [vmem:[#allocation17 + $0x2b8] sm:$0xff]
    %v1350 = vld [vmem:[#allocation17 + $0x2c0] sm:$0xff]
    %v1351 = vld [vmem:[#allocation17 + $0x2c8] sm:$0xff]
    %v1352 = vld [vmem:[#allocation17 + $0x2d0] sm:$0xff]
    %v1353 = vld [vmem:[#allocation17 + $0x2d8] sm:$0xff]
    %v1354 = vld [vmem:[#allocation17 + $0x2e0] sm:$0xff]
    %v1355 = vld [vmem:[#allocation17 + $0x2e8] sm:$0xff]
    %v1356 = vld [vmem:[#allocation17 + $0x2f0] sm:$0xff]
    %v1357 = vld [vmem:[#allocation17 + $0x2f8] sm:$0xff]
    %v1358 = vld [vmem:[#allocation17 + $0x300] sm:$0xff]
    %v1359 = vld [vmem:[#allocation17 + $0x308] sm:$0xff]
    %v1360 = vld [vmem:[#allocation17 + $0x310] sm:$0xff]
    %v1361 = vld [vmem:[#allocation17 + $0x318] sm:$0xff]
    %v1362 = vld [vmem:[#allocation17 + $0x320] sm:$0xff]
    %v1363 = vld [vmem:[#allocation17 + $0x328] sm:$0xff]
    %v1364 = vld [vmem:[#allocation17 + $0x330] sm:$0xff]
    %v1365 = vld [vmem:[#allocation17 + $0x338] sm:$0xff]
    %v1366 = vld [vmem:[#allocation17 + $0x340] sm:$0xff]
    %v1367 = vld [vmem:[#allocation17 + $0x348] sm:$0xff]
    %v1368 = vld [vmem:[#allocation17 + $0x350] sm:$0xff]
    %v1369 = vld [vmem:[#allocation17 + $0x358] sm:$0xff]
    %v1370 = vld [vmem:[#allocation17 + $0x360] sm:$0xff]
    %v1371 = vld [vmem:[#allocation17 + $0x368] sm:$0xff]
    %v1372 = vld [vmem:[#allocation17 + $0x370] sm:$0xff]
    %v1373 = vld [vmem:[#allocation17 + $0x378] sm:$0xff]
    %v1374 = vld [vmem:[#allocation17 + $0x380] sm:$0xff]
    %v1375 = vld [vmem:[#allocation17 + $0x388] sm:$0xff]
    %v1376 = vld [vmem:[#allocation17 + $0x390] sm:$0xff]
    %v1377 = vld [vmem:[#allocation17 + $0x398] sm:$0xff]
    %v1378 = vld [vmem:[#allocation17 + $0x3a0] sm:$0xff]
    %v1379 = vld [vmem:[#allocation17 + $0x3a8] sm:$0xff]
    %v1380 = vld [vmem:[#allocation17 + $0x3b0] sm:$0xff]
    %v1381 = vld [vmem:[#allocation17 + $0x3b8] sm:$0xff]
    %v1382 = vld [vmem:[#allocation17 + $0x3c0] sm:$0xff]
    %v1383 = vld [vmem:[#allocation17 + $0x3c8] sm:$0xff]
    %v1384 = vld [vmem:[#allocation17 + $0x3d0] sm:$0xff]
    %v1385 = vld [vmem:[#allocation17 + $0x3d8] sm:$0xff]
    %v1386 = vld [vmem:[#allocation17 + $0x3e0] sm:$0xff]
    %v1387 = vld [vmem:[#allocation17 + $0x3e8] sm:$0xff]
    %v1388 = vld [vmem:[#allocation17 + $0x3f0] sm:$0xff]
    %v1389 = vld [vmem:[#allocation17 + $0x3f8] sm:$0xff]
    %v1518 = vunpack.c.l.b16 %v1262
    %v1519 = vunpack.c.h.b16 %v1262
    %v1520 = vunpack.c.l.b16 %v1263
    %v1521 = vunpack.c.h.b16 %v1263
    %v1522 = vunpack.c.l.b16 %v1264
    %v1523 = vunpack.c.h.b16 %v1264
    %v1524 = vunpack.c.l.b16 %v1265
    %v1525 = vunpack.c.h.b16 %v1265
    %v1526 = vunpack.c.l.b16 %v1266
    %v1527 = vunpack.c.h.b16 %v1266
    %v1528 = vunpack.c.l.b16 %v1267
    %v1529 = vunpack.c.h.b16 %v1267
    %v1530 = vunpack.c.l.b16 %v1268
    %v1531 = vunpack.c.h.b16 %v1268
    %v1532 = vunpack.c.l.b16 %v1269
    %v1533 = vunpack.c.h.b16 %v1269
    %v1534 = vunpack.c.l.b16 %v1270
    %v1535 = vunpack.c.h.b16 %v1270
    %v1536 = vunpack.c.l.b16 %v1271
    %v1537 = vunpack.c.h.b16 %v1271
    %v1538 = vunpack.c.l.b16 %v1272
    %v1539 = vunpack.c.h.b16 %v1272
    %v1540 = vunpack.c.l.b16 %v1273
    %v1541 = vunpack.c.h.b16 %v1273
    %v1542 = vunpack.c.l.b16 %v1274
    %v1543 = vunpack.c.h.b16 %v1274
    %v1544 = vunpack.c.l.b16 %v1275
    %v1545 = vunpack.c.h.b16 %v1275
    %v1546 = vunpack.c.l.b16 %v1276
    %v1547 = vunpack.c.h.b16 %v1276
    %v1548 = vunpack.c.l.b16 %v1277
    %v1549 = vunpack.c.h.b16 %v1277
    %v1550 = vunpack.c.l.b16 %v1278
    %v1551 = vunpack.c.h.b16 %v1278
    %v1552 = vunpack.c.l.b16 %v1279
    %v1553 = vunpack.c.h.b16 %v1279
    %v1554 = vunpack.c.l.b16 %v1280
    %v1555 = vunpack.c.h.b16 %v1280
    %v1556 = vunpack.c.l.b16 %v1281
    %v1557 = vunpack.c.h.b16 %v1281
    %v1558 = vunpack.c.l.b16 %v1282
    %v1559 = vunpack.c.h.b16 %v1282
    %v1560 = vunpack.c.l.b16 %v1283
    %v1561 = vunpack.c.h.b16 %v1283
    %v1562 = vunpack.c.l.b16 %v1284
    %v1563 = vunpack.c.h.b16 %v1284
    %v1564 = vunpack.c.l.b16 %v1285
    %v1565 = vunpack.c.h.b16 %v1285
    %v1566 = vunpack.c.l.b16 %v1286
    %v1567 = vunpack.c.h.b16 %v1286
    %v1568 = vunpack.c.l.b16 %v1287
    %v1569 = vunpack.c.h.b16 %v1287
    %v1570 = vunpack.c.l.b16 %v1288
    %v1571 = vunpack.c.h.b16 %v1288
    %v1572 = vunpack.c.l.b16 %v1289
    %v1573 = vunpack.c.h.b16 %v1289
    %v1574 = vunpack.c.l.b16 %v1290
    %v1575 = vunpack.c.h.b16 %v1290
    %v1576 = vunpack.c.l.b16 %v1291
    %v1577 = vunpack.c.h.b16 %v1291
    %v1578 = vunpack.c.l.b16 %v1292
    %v1579 = vunpack.c.h.b16 %v1292
    %v1580 = vunpack.c.l.b16 %v1293
    %v1581 = vunpack.c.h.b16 %v1293
    %v1582 = vunpack.c.l.b16 %v1294
    %v1583 = vunpack.c.h.b16 %v1294
    %v1584 = vunpack.c.l.b16 %v1295
    %v1585 = vunpack.c.h.b16 %v1295
    %v1586 = vunpack.c.l.b16 %v1296
    %v1587 = vunpack.c.h.b16 %v1296
    %v1588 = vunpack.c.l.b16 %v1297
    %v1589 = vunpack.c.h.b16 %v1297
    %v1590 = vunpack.c.l.b16 %v1298
    %v1591 = vunpack.c.h.b16 %v1298
    %v1592 = vunpack.c.l.b16 %v1299
    %v1593 = vunpack.c.h.b16 %v1299
    %v1594 = vunpack.c.l.b16 %v1300
    %v1595 = vunpack.c.h.b16 %v1300
    %v1596 = vunpack.c.l.b16 %v1301
    %v1597 = vunpack.c.h.b16 %v1301
    %v1598 = vunpack.c.l.b16 %v1302
    %v1599 = vunpack.c.h.b16 %v1302
    %v1600 = vunpack.c.l.b16 %v1303
    %v1601 = vunpack.c.h.b16 %v1303
    %v1602 = vunpack.c.l.b16 %v1304
    %v1603 = vunpack.c.h.b16 %v1304
    %v1604 = vunpack.c.l.b16 %v1305
    %v1605 = vunpack.c.h.b16 %v1305
    %v1606 = vunpack.c.l.b16 %v1306
    %v1607 = vunpack.c.h.b16 %v1306
    %v1608 = vunpack.c.l.b16 %v1307
    %v1609 = vunpack.c.h.b16 %v1307
    %v1610 = vunpack.c.l.b16 %v1308
    %v1611 = vunpack.c.h.b16 %v1308
    %v1612 = vunpack.c.l.b16 %v1309
    %v1613 = vunpack.c.h.b16 %v1309
    %v1614 = vunpack.c.l.b16 %v1310
    %v1615 = vunpack.c.h.b16 %v1310
    %v1616 = vunpack.c.l.b16 %v1311
    %v1617 = vunpack.c.h.b16 %v1311
    %v1618 = vunpack.c.l.b16 %v1312
    %v1619 = vunpack.c.h.b16 %v1312
    %v1620 = vunpack.c.l.b16 %v1313
    %v1621 = vunpack.c.h.b16 %v1313
    %v1622 = vunpack.c.l.b16 %v1314
    %v1623 = vunpack.c.h.b16 %v1314
    %v1624 = vunpack.c.l.b16 %v1315
    %v1625 = vunpack.c.h.b16 %v1315
    %v1626 = vunpack.c.l.b16 %v1316
    %v1627 = vunpack.c.h.b16 %v1316
    %v1628 = vunpack.c.l.b16 %v1317
    %v1629 = vunpack.c.h.b16 %v1317
    %v1630 = vunpack.c.l.b16 %v1318
    %v1631 = vunpack.c.h.b16 %v1318
    %v1632 = vunpack.c.l.b16 %v1319
    %v1633 = vunpack.c.h.b16 %v1319
    %v1634 = vunpack.c.l.b16 %v1320
    %v1635 = vunpack.c.h.b16 %v1320
    %v1636 = vunpack.c.l.b16 %v1321
    %v1637 = vunpack.c.h.b16 %v1321
    %v1638 = vunpack.c.l.b16 %v1322
    %v1639 = vunpack.c.h.b16 %v1322
    %v1640 = vunpack.c.l.b16 %v1323
    %v1641 = vunpack.c.h.b16 %v1323
    %v1642 = vunpack.c.l.b16 %v1324
    %v1643 = vunpack.c.h.b16 %v1324
    %v1644 = vunpack.c.l.b16 %v1325
    %v1645 = vunpack.c.h.b16 %v1325
    %v1646 = vunpack.c.l.b16 %v1326
    %v1647 = vunpack.c.h.b16 %v1326
    %v1648 = vunpack.c.l.b16 %v1327
    %v1649 = vunpack.c.h.b16 %v1327
    %v1650 = vunpack.c.l.b16 %v1328
    %v1651 = vunpack.c.h.b16 %v1328
    %v1652 = vunpack.c.l.b16 %v1329
    %v1653 = vunpack.c.h.b16 %v1329
    %v1654 = vunpack.c.l.b16 %v1330
    %v1655 = vunpack.c.h.b16 %v1330
    %v1656 = vunpack.c.l.b16 %v1331
    %v1657 = vunpack.c.h.b16 %v1331
    %v1658 = vunpack.c.l.b16 %v1332
    %v1659 = vunpack.c.h.b16 %v1332
    %v1660 = vunpack.c.l.b16 %v1333
    %v1661 = vunpack.c.h.b16 %v1333
    %v1662 = vunpack.c.l.b16 %v1334
    %v1663 = vunpack.c.h.b16 %v1334
    %v1664 = vunpack.c.l.b16 %v1335
    %v1665 = vunpack.c.h.b16 %v1335
    %v1666 = vunpack.c.l.b16 %v1336
    %v1667 = vunpack.c.h.b16 %v1336
    %v1668 = vunpack.c.l.b16 %v1337
    %v1669 = vunpack.c.h.b16 %v1337
    %v1670 = vunpack.c.l.b16 %v1338
    %v1671 = vunpack.c.h.b16 %v1338
    %v1672 = vunpack.c.l.b16 %v1339
    %v1673 = vunpack.c.h.b16 %v1339
    %v1674 = vunpack.c.l.b16 %v1340
    %v1675 = vunpack.c.h.b16 %v1340
    %v1676 = vunpack.c.l.b16 %v1341
    %v1677 = vunpack.c.h.b16 %v1341
    %v1678 = vunpack.c.l.b16 %v1342
    %v1679 = vunpack.c.h.b16 %v1342
    %v1680 = vunpack.c.l.b16 %v1343
    %v1681 = vunpack.c.h.b16 %v1343
    %v1682 = vunpack.c.l.b16 %v1344
    %v1683 = vunpack.c.h.b16 %v1344
    %v1684 = vunpack.c.l.b16 %v1345
    %v1685 = vunpack.c.h.b16 %v1345
    %v1686 = vunpack.c.l.b16 %v1346
    %v1687 = vunpack.c.h.b16 %v1346
    %v1688 = vunpack.c.l.b16 %v1347
    %v1689 = vunpack.c.h.b16 %v1347
    %v1690 = vunpack.c.l.b16 %v1348
    %v1691 = vunpack.c.h.b16 %v1348
    %v1692 = vunpack.c.l.b16 %v1349
    %v1693 = vunpack.c.h.b16 %v1349
    %v1694 = vunpack.c.l.b16 %v1350
    %v1695 = vunpack.c.h.b16 %v1350
    %v1696 = vunpack.c.l.b16 %v1351
    %v1697 = vunpack.c.h.b16 %v1351
    %v1698 = vunpack.c.l.b16 %v1352
    %v1699 = vunpack.c.h.b16 %v1352
    %v1700 = vunpack.c.l.b16 %v1353
    %v1701 = vunpack.c.h.b16 %v1353
    %v1702 = vunpack.c.l.b16 %v1354
    %v1703 = vunpack.c.h.b16 %v1354
    %v1704 = vunpack.c.l.b16 %v1355
    %v1705 = vunpack.c.h.b16 %v1355
    %v1706 = vunpack.c.l.b16 %v1356
    %v1707 = vunpack.c.h.b16 %v1356
    %v1708 = vunpack.c.l.b16 %v1357
    %v1709 = vunpack.c.h.b16 %v1357
    %v1710 = vunpack.c.l.b16 %v1358
    %v1711 = vunpack.c.h.b16 %v1358
    %v1712 = vunpack.c.l.b16 %v1359
    %v1713 = vunpack.c.h.b16 %v1359
    %v1714 = vunpack.c.l.b16 %v1360
    %v1715 = vunpack.c.h.b16 %v1360
    %v1716 = vunpack.c.l.b16 %v1361
    %v1717 = vunpack.c.h.b16 %v1361
    %v1718 = vunpack.c.l.b16 %v1362
    %v1719 = vunpack.c.h.b16 %v1362
    %v1720 = vunpack.c.l.b16 %v1363
    %v1721 = vunpack.c.h.b16 %v1363
    %v1722 = vunpack.c.l.b16 %v1364
    %v1723 = vunpack.c.h.b16 %v1364
    %v1724 = vunpack.c.l.b16 %v1365
    %v1725 = vunpack.c.h.b16 %v1365
    %v1726 = vunpack.c.l.b16 %v1366
    %v1727 = vunpack.c.h.b16 %v1366
    %v1728 = vunpack.c.l.b16 %v1367
    %v1729 = vunpack.c.h.b16 %v1367
    %v1730 = vunpack.c.l.b16 %v1368
    %v1731 = vunpack.c.h.b16 %v1368
    %v1732 = vunpack.c.l.b16 %v1369
    %v1733 = vunpack.c.h.b16 %v1369
    %v1734 = vunpack.c.l.b16 %v1370
    %v1735 = vunpack.c.h.b16 %v1370
    %v1736 = vunpack.c.l.b16 %v1371
    %v1737 = vunpack.c.h.b16 %v1371
    %v1738 = vunpack.c.l.b16 %v1372
    %v1739 = vunpack.c.h.b16 %v1372
    %v1740 = vunpack.c.l.b16 %v1373
    %v1741 = vunpack.c.h.b16 %v1373
    %v1742 = vunpack.c.l.b16 %v1374
    %v1743 = vunpack.c.h.b16 %v1374
    %v1744 = vunpack.c.l.b16 %v1375
    %v1745 = vunpack.c.h.b16 %v1375
    %v1746 = vunpack.c.l.b16 %v1376
    %v1747 = vunpack.c.h.b16 %v1376
    %v1748 = vunpack.c.l.b16 %v1377
    %v1749 = vunpack.c.h.b16 %v1377
    %v1750 = vunpack.c.l.b16 %v1378
    %v1751 = vunpack.c.h.b16 %v1378
    %v1752 = vunpack.c.l.b16 %v1379
    %v1753 = vunpack.c.h.b16 %v1379
    %v1754 = vunpack.c.l.b16 %v1380
    %v1755 = vunpack.c.h.b16 %v1380
    %v1756 = vunpack.c.l.b16 %v1381
    %v1757 = vunpack.c.h.b16 %v1381
    %v1758 = vunpack.c.l.b16 %v1382
    %v1759 = vunpack.c.h.b16 %v1382
    %v1760 = vunpack.c.l.b16 %v1383
    %v1761 = vunpack.c.h.b16 %v1383
    %v1762 = vunpack.c.l.b16 %v1384
    %v1763 = vunpack.c.h.b16 %v1384
    %v1764 = vunpack.c.l.b16 %v1385
    %v1765 = vunpack.c.h.b16 %v1385
    %v1766 = vunpack.c.l.b16 %v1386
    %v1767 = vunpack.c.h.b16 %v1386
    %v1768 = vunpack.c.l.b16 %v1387
    %v1769 = vunpack.c.h.b16 %v1387
    %v1770 = vunpack.c.l.b16 %v1388
    %v1771 = vunpack.c.h.b16 %v1388
    %v1772 = vunpack.c.l.b16 %v1389
    %v1773 = vunpack.c.h.b16 %v1389
    %v1774 = vpack.c.b16 %v1526, %v1518
    %v1775 = vpack.c.b16 %v1527, %v1519
    %v1776 = vpack.c.b16 %v1528, %v1520
    %v1777 = vpack.c.b16 %v1529, %v1521
    %v1778 = vpack.c.b16 %v1530, %v1522
    %v1779 = vpack.c.b16 %v1531, %v1523
    %v1780 = vpack.c.b16 %v1532, %v1524
    %v1781 = vpack.c.b16 %v1533, %v1525
    %v1782 = vpack.c.b16 %v1542, %v1534
    %v1783 = vpack.c.b16 %v1543, %v1535
    %v1784 = vpack.c.b16 %v1544, %v1536
    %v1785 = vpack.c.b16 %v1545, %v1537
    %v1786 = vpack.c.b16 %v1546, %v1538
    %v1787 = vpack.c.b16 %v1547, %v1539
    %v1788 = vpack.c.b16 %v1548, %v1540
    %v1789 = vpack.c.b16 %v1549, %v1541
    %v1790 = vpack.c.b16 %v1558, %v1550
    %v1791 = vpack.c.b16 %v1559, %v1551
    %v1792 = vpack.c.b16 %v1560, %v1552
    %v1793 = vpack.c.b16 %v1561, %v1553
    %v1794 = vpack.c.b16 %v1562, %v1554
    %v1795 = vpack.c.b16 %v1563, %v1555
    %v1796 = vpack.c.b16 %v1564, %v1556
    %v1797 = vpack.c.b16 %v1565, %v1557
    %v1798 = vpack.c.b16 %v1574, %v1566
    %v1799 = vpack.c.b16 %v1575, %v1567
    %v1800 = vpack.c.b16 %v1576, %v1568
    %v1801 = vpack.c.b16 %v1577, %v1569
    %v1802 = vpack.c.b16 %v1578, %v1570
    %v1803 = vpack.c.b16 %v1579, %v1571
    %v1804 = vpack.c.b16 %v1580, %v1572
    %v1805 = vpack.c.b16 %v1581, %v1573
    %v1806 = vpack.c.b16 %v1590, %v1582
    %v1807 = vpack.c.b16 %v1591, %v1583
    %v1808 = vpack.c.b16 %v1592, %v1584
    %v1809 = vpack.c.b16 %v1593, %v1585
    %v1810 = vpack.c.b16 %v1594, %v1586
    %v1811 = vpack.c.b16 %v1595, %v1587
    %v1812 = vpack.c.b16 %v1596, %v1588
    %v1813 = vpack.c.b16 %v1597, %v1589
    %v1814 = vpack.c.b16 %v1606, %v1598
    %v1815 = vpack.c.b16 %v1607, %v1599
    %v1816 = vpack.c.b16 %v1608, %v1600
    %v1817 = vpack.c.b16 %v1609, %v1601
    %v1818 = vpack.c.b16 %v1610, %v1602
    %v1819 = vpack.c.b16 %v1611, %v1603
    %v1820 = vpack.c.b16 %v1612, %v1604
    %v1821 = vpack.c.b16 %v1613, %v1605
    %v1822 = vpack.c.b16 %v1622, %v1614
    %v1823 = vpack.c.b16 %v1623, %v1615
    %v1824 = vpack.c.b16 %v1624, %v1616
    %v1825 = vpack.c.b16 %v1625, %v1617
    %v1826 = vpack.c.b16 %v1626, %v1618
    %v1827 = vpack.c.b16 %v1627, %v1619
    %v1828 = vpack.c.b16 %v1628, %v1620
    %v1829 = vpack.c.b16 %v1629, %v1621
    %v1830 = vpack.c.b16 %v1638, %v1630
    %v1831 = vpack.c.b16 %v1639, %v1631
    %v1832 = vpack.c.b16 %v1640, %v1632
    %v1833 = vpack.c.b16 %v1641, %v1633
    %v1834 = vpack.c.b16 %v1642, %v1634
    %v1835 = vpack.c.b16 %v1643, %v1635
    %v1836 = vpack.c.b16 %v1644, %v1636
    %v1837 = vpack.c.b16 %v1645, %v1637
    %v1838 = vpack.c.b16 %v1654, %v1646
    %v1839 = vpack.c.b16 %v1655, %v1647
    %v1840 = vpack.c.b16 %v1656, %v1648
    %v1841 = vpack.c.b16 %v1657, %v1649
    %v1842 = vpack.c.b16 %v1658, %v1650
    %v1843 = vpack.c.b16 %v1659, %v1651
    %v1844 = vpack.c.b16 %v1660, %v1652
    %v1845 = vpack.c.b16 %v1661, %v1653
    %v1846 = vpack.c.b16 %v1670, %v1662
    %v1847 = vpack.c.b16 %v1671, %v1663
    %v1848 = vpack.c.b16 %v1672, %v1664
    %v1849 = vpack.c.b16 %v1673, %v1665
    %v1850 = vpack.c.b16 %v1674, %v1666
    %v1851 = vpack.c.b16 %v1675, %v1667
    %v1852 = vpack.c.b16 %v1676, %v1668
    %v1853 = vpack.c.b16 %v1677, %v1669
    %v1854 = vpack.c.b16 %v1686, %v1678
    %v1855 = vpack.c.b16 %v1687, %v1679
    %v1856 = vpack.c.b16 %v1688, %v1680
    %v1857 = vpack.c.b16 %v1689, %v1681
    %v1858 = vpack.c.b16 %v1690, %v1682
    %v1859 = vpack.c.b16 %v1691, %v1683
    %v1860 = vpack.c.b16 %v1692, %v1684
    %v1861 = vpack.c.b16 %v1693, %v1685
    %v1862 = vpack.c.b16 %v1702, %v1694
    %v1863 = vpack.c.b16 %v1703, %v1695
    %v1864 = vpack.c.b16 %v1704, %v1696
    %v1865 = vpack.c.b16 %v1705, %v1697
    %v1866 = vpack.c.b16 %v1706, %v1698
    %v1867 = vpack.c.b16 %v1707, %v1699
    %v1868 = vpack.c.b16 %v1708, %v1700
    %v1869 = vpack.c.b16 %v1709, %v1701
    %v1870 = vpack.c.b16 %v1718, %v1710
    %v1871 = vpack.c.b16 %v1719, %v1711
    %v1872 = vpack.c.b16 %v1720, %v1712
    %v1873 = vpack.c.b16 %v1721, %v1713
    %v1874 = vpack.c.b16 %v1722, %v1714
    %v1875 = vpack.c.b16 %v1723, %v1715
    %v1876 = vpack.c.b16 %v1724, %v1716
    %v1877 = vpack.c.b16 %v1725, %v1717
    %v1878 = vpack.c.b16 %v1734, %v1726
    %v1879 = vpack.c.b16 %v1735, %v1727
    %v1880 = vpack.c.b16 %v1736, %v1728
    %v1881 = vpack.c.b16 %v1737, %v1729
    %v1882 = vpack.c.b16 %v1738, %v1730
    %v1883 = vpack.c.b16 %v1739, %v1731
    %v1884 = vpack.c.b16 %v1740, %v1732
    %v1885 = vpack.c.b16 %v1741, %v1733
    %v1886 = vpack.c.b16 %v1750, %v1742
    %v1887 = vpack.c.b16 %v1751, %v1743
    %v1888 = vpack.c.b16 %v1752, %v1744
    %v1889 = vpack.c.b16 %v1753, %v1745
    %v1890 = vpack.c.b16 %v1754, %v1746
    %v1891 = vpack.c.b16 %v1755, %v1747
    %v1892 = vpack.c.b16 %v1756, %v1748
    %v1893 = vpack.c.b16 %v1757, %v1749
    %v1894 = vpack.c.b16 %v1766, %v1758
    %v1895 = vpack.c.b16 %v1767, %v1759
    %v1896 = vpack.c.b16 %v1768, %v1760
    %v1897 = vpack.c.b16 %v1769, %v1761
    %v1898 = vpack.c.b16 %v1770, %v1762
    %v1899 = vpack.c.b16 %v1771, %v1763
    %v1900 = vpack.c.b16 %v1772, %v1764
    %v1901 = vpack.c.b16 %v1773, %v1765
    %2030 = vmatpush.bf16.msra.mxu0 %v1830
    %2031 = vmatpush.bf16.msra.mxu0 %v1822
    %2032 = vmatpush.bf16.msra.mxu0 %v1814
    %2033 = vmatpush.bf16.msra.mxu0 %v1806
    %2034 = vmatpush.bf16.msra.mxu0 %v1798
    %2035 = vmatpush.bf16.msra.mxu0 %v1790
    %2036 = vmatpush.bf16.msra.mxu0 %v1782
    %2037 = vmatpush.bf16.msra.mxu0 %v1774
    %2038 = vmatmul.bf16.gmra.mxu0 %v1260
    %v2039 = vpop.f32.mrf.mxu0
    %v2040 = vadd.f32 0.0, %v2039
    %v2041 = vpop.f32.mrf.mxu0
    %v2042 = vadd.f32 0.0, %v2041
    %2043 = vdwg.mxu0
    %2044 = vmatpush.bf16.msra.mxu0 %v1894
    %2045 = vmatpush.bf16.msra.mxu0 %v1886
    %2046 = vmatpush.bf16.msra.mxu0 %v1878
    %2047 = vmatpush.bf16.msra.mxu0 %v1870
    %2048 = vmatpush.bf16.msra.mxu0 %v1862
    %2049 = vmatpush.bf16.msra.mxu0 %v1854
    %2050 = vmatpush.bf16.msra.mxu0 %v1846
    %2051 = vmatpush.bf16.msra.mxu0 %v1838
    %2052 = vmatmul.bf16.gmra.mxu0 %v1261
    %v2053 = vpop.f32.mrf.mxu0
    %v2054 = vadd.f32 %v2040, %v2053
    %v2055 = vpop.f32.mrf.mxu0
    %v2056 = vadd.f32 %v2042, %v2055
    %2057 = vdwg.mxu0
    %2058 = vmatpush.bf16.msra.mxu0 %v1831
    %2059 = vmatpush.bf16.msra.mxu0 %v1823
    %2060 = vmatpush.bf16.msra.mxu0 %v1815
    %2061 = vmatpush.bf16.msra.mxu0 %v1807
    %2062 = vmatpush.bf16.msra.mxu0 %v1799
    %2063 = vmatpush.bf16.msra.mxu0 %v1791
    %2064 = vmatpush.bf16.msra.mxu0 %v1783
    %2065 = vmatpush.bf16.msra.mxu0 %v1775
    %2066 = vmatmul.bf16.gmra.mxu0 %v1260
    %v2067 = vpop.f32.mrf.mxu0
    %v2068 = vadd.f32 0.0, %v2067
    %v2069 = vpop.f32.mrf.mxu0
    %v2070 = vadd.f32 0.0, %v2069
    %2071 = vdwg.mxu0
    %2072 = vmatpush.bf16.msra.mxu0 %v1895
    %2073 = vmatpush.bf16.msra.mxu0 %v1887
    %2074 = vmatpush.bf16.msra.mxu0 %v1879
    %2075 = vmatpush.bf16.msra.mxu0 %v1871
    %2076 = vmatpush.bf16.msra.mxu0 %v1863
    %2077 = vmatpush.bf16.msra.mxu0 %v1855
    %2078 = vmatpush.bf16.msra.mxu0 %v1847
    %2079 = vmatpush.bf16.msra.mxu0 %v1839
    %2080 = vmatmul.bf16.gmra.mxu0 %v1261
    %v2081 = vpop.f32.mrf.mxu0
    %v2082 = vadd.f32 %v2068, %v2081
    %v2083 = vpop.f32.mrf.mxu0
    %v2084 = vadd.f32 %v2070, %v2083
    %2085 = vdwg.mxu0
    %2086 = vmatpush.bf16.msra.mxu0 %v1832
    %2087 = vmatpush.bf16.msra.mxu0 %v1824
    %2088 = vmatpush.bf16.msra.mxu0 %v1816
    %2089 = vmatpush.bf16.msra.mxu0 %v1808
    %2090 = vmatpush.bf16.msra.mxu0 %v1800
    %2091 = vmatpush.bf16.msra.mxu0 %v1792
    %2092 = vmatpush.bf16.msra.mxu0 %v1784
    %2093 = vmatpush.bf16.msra.mxu0 %v1776
    %2094 = vmatmul.bf16.gmra.mxu0 %v1260
    %v2095 = vpop.f32.mrf.mxu0
    %v2096 = vadd.f32 0.0, %v2095
    %v2097 = vpop.f32.mrf.mxu0
    %v2098 = vadd.f32 0.0, %v2097
    %2099 = vdwg.mxu0
    %2100 = vmatpush.bf16.msra.mxu0 %v1896
    %2101 = vmatpush.bf16.msra.mxu0 %v1888
    %2102 = vmatpush.bf16.msra.mxu0 %v1880
    %2103 = vmatpush.bf16.msra.mxu0 %v1872
    %2104 = vmatpush.bf16.msra.mxu0 %v1864
    %2105 = vmatpush.bf16.msra.mxu0 %v1856
    %2106 = vmatpush.bf16.msra.mxu0 %v1848
    %2107 = vmatpush.bf16.msra.mxu0 %v1840
    %2108 = vmatmul.bf16.gmra.mxu0 %v1261
    %v2109 = vpop.f32.mrf.mxu0
    %v2110 = vadd.f32 %v2096, %v2109
    %v2111 = vpop.f32.mrf.mxu0
    %v2112 = vadd.f32 %v2098, %v2111
    %2113 = vdwg.mxu0
    %2114 = vmatpush.bf16.msra.mxu0 %v1833
    %2115 = vmatpush.bf16.msra.mxu0 %v1825
    %2116 = vmatpush.bf16.msra.mxu0 %v1817
    %2117 = vmatpush.bf16.msra.mxu0 %v1809
    %2118 = vmatpush.bf16.msra.mxu0 %v1801
    %2119 = vmatpush.bf16.msra.mxu0 %v1793
    %2120 = vmatpush.bf16.msra.mxu0 %v1785
    %2121 = vmatpush.bf16.msra.mxu0 %v1777
    %2122 = vmatmul.bf16.gmra.mxu0 %v1260
    %v2123 = vpop.f32.mrf.mxu0
    %v2124 = vadd.f32 0.0, %v2123
    %v2125 = vpop.f32.mrf.mxu0
    %v2126 = vadd.f32 0.0, %v2125
    %2127 = vdwg.mxu0
    %2128 = vmatpush.bf16.msra.mxu0 %v1897
    %2129 = vmatpush.bf16.msra.mxu0 %v1889
    %2130 = vmatpush.bf16.msra.mxu0 %v1881
    %2131 = vmatpush.bf16.msra.mxu0 %v1873
    %2132 = vmatpush.bf16.msra.mxu0 %v1865
    %2133 = vmatpush.bf16.msra.mxu0 %v1857
    %2134 = vmatpush.bf16.msra.mxu0 %v1849
    %2135 = vmatpush.bf16.msra.mxu0 %v1841
    %2136 = vmatmul.bf16.gmra.mxu0 %v1261
    %v2137 = vpop.f32.mrf.mxu0
    %v2138 = vadd.f32 %v2124, %v2137
    %v2139 = vpop.f32.mrf.mxu0
    %v2140 = vadd.f32 %v2126, %v2139
    %2141 = vdwg.mxu0
    %2142 = vmatpush.bf16.msra.mxu0 %v1834
    %2143 = vmatpush.bf16.msra.mxu0 %v1826
    %2144 = vmatpush.bf16.msra.mxu0 %v1818
    %2145 = vmatpush.bf16.msra.mxu0 %v1810
    %2146 = vmatpush.bf16.msra.mxu0 %v1802
    %2147 = vmatpush.bf16.msra.mxu0 %v1794
    %2148 = vmatpush.bf16.msra.mxu0 %v1786
    %2149 = vmatpush.bf16.msra.mxu0 %v1778
    %2150 = vmatmul.bf16.gmra.mxu0 %v1260
    %v2151 = vpop.f32.mrf.mxu0
    %v2152 = vadd.f32 0.0, %v2151
    %v2153 = vpop.f32.mrf.mxu0
    %v2154 = vadd.f32 0.0, %v2153
    %2155 = vdwg.mxu0
    %2156 = vmatpush.bf16.msra.mxu0 %v1898
    %2157 = vmatpush.bf16.msra.mxu0 %v1890
    %2158 = vmatpush.bf16.msra.mxu0 %v1882
    %2159 = vmatpush.bf16.msra.mxu0 %v1874
    %2160 = vmatpush.bf16.msra.mxu0 %v1866
    %2161 = vmatpush.bf16.msra.mxu0 %v1858
    %2162 = vmatpush.bf16.msra.mxu0 %v1850
    %2163 = vmatpush.bf16.msra.mxu0 %v1842
    %2164 = vmatmul.bf16.gmra.mxu0 %v1261
    %v2165 = vpop.f32.mrf.mxu0
    %v2166 = vadd.f32 %v2152, %v2165
    %v2167 = vpop.f32.mrf.mxu0
    %v2168 = vadd.f32 %v2154, %v2167
    %2169 = vdwg.mxu0
    %2170 = vmatpush.bf16.msra.mxu0 %v1835
    %2171 = vmatpush.bf16.msra.mxu0 %v1827
    %2172 = vmatpush.bf16.msra.mxu0 %v1819
    %2173 = vmatpush.bf16.msra.mxu0 %v1811
    %2174 = vmatpush.bf16.msra.mxu0 %v1803
    %2175 = vmatpush.bf16.msra.mxu0 %v1795
    %2176 = vmatpush.bf16.msra.mxu0 %v1787
    %2177 = vmatpush.bf16.msra.mxu0 %v1779
    %2178 = vmatmul.bf16.gmra.mxu0 %v1260
    %v2179 = vpop.f32.mrf.mxu0
    %v2180 = vadd.f32 0.0, %v2179
    %v2181 = vpop.f32.mrf.mxu0
    %v2182 = vadd.f32 0.0, %v2181
    %2183 = vdwg.mxu0
    %2184 = vmatpush.bf16.msra.mxu0 %v1899
    %2185 = vmatpush.bf16.msra.mxu0 %v1891
    %2186 = vmatpush.bf16.msra.mxu0 %v1883
    %2187 = vmatpush.bf16.msra.mxu0 %v1875
    %2188 = vmatpush.bf16.msra.mxu0 %v1867
    %2189 = vmatpush.bf16.msra.mxu0 %v1859
    %2190 = vmatpush.bf16.msra.mxu0 %v1851
    %2191 = vmatpush.bf16.msra.mxu0 %v1843
    %2192 = vmatmul.bf16.gmra.mxu0 %v1261
    %v2193 = vpop.f32.mrf.mxu0
    %v2194 = vadd.f32 %v2180, %v2193
    %v2195 = vpop.f32.mrf.mxu0
    %v2196 = vadd.f32 %v2182, %v2195
    %2197 = vdwg.mxu0
    %2198 = vmatpush.bf16.msra.mxu0 %v1836
    %2199 = vmatpush.bf16.msra.mxu0 %v1828
    %2200 = vmatpush.bf16.msra.mxu0 %v1820
    %2201 = vmatpush.bf16.msra.mxu0 %v1812
    %2202 = vmatpush.bf16.msra.mxu0 %v1804
    %2203 = vmatpush.bf16.msra.mxu0 %v1796
    %2204 = vmatpush.bf16.msra.mxu0 %v1788
    %2205 = vmatpush.bf16.msra.mxu0 %v1780
    %2206 = vmatmul.bf16.gmra.mxu0 %v1260
    %v2207 = vpop.f32.mrf.mxu0
    %v2208 = vadd.f32 0.0, %v2207
    %v2209 = vpop.f32.mrf.mxu0
    %v2210 = vadd.f32 0.0, %v2209
    %2211 = vdwg.mxu0
    %2212 = vmatpush.bf16.msra.mxu0 %v1900
    %2213 = vmatpush.bf16.msra.mxu0 %v1892
    %2214 = vmatpush.bf16.msra.mxu0 %v1884
    %2215 = vmatpush.bf16.msra.mxu0 %v1876
    %2216 = vmatpush.bf16.msra.mxu0 %v1868
    %2217 = vmatpush.bf16.msra.mxu0 %v1860
    %2218 = vmatpush.bf16.msra.mxu0 %v1852
    %2219 = vmatpush.bf16.msra.mxu0 %v1844
    %2220 = vmatmul.bf16.gmra.mxu0 %v1261
    %v2221 = vpop.f32.mrf.mxu0
    %v2222 = vadd.f32 %v2208, %v2221
    %v2223 = vpop.f32.mrf.mxu0
    %v2224 = vadd.f32 %v2210, %v2223
    %2225 = vdwg.mxu0
    %2226 = vmatpush.bf16.msra.mxu0 %v1837
    %2227 = vmatpush.bf16.msra.mxu0 %v1829
    %2228 = vmatpush.bf16.msra.mxu0 %v1821
    %2229 = vmatpush.bf16.msra.mxu0 %v1813
    %2230 = vmatpush.bf16.msra.mxu0 %v1805
    %2231 = vmatpush.bf16.msra.mxu0 %v1797
    %2232 = vmatpush.bf16.msra.mxu0 %v1789
    %2233 = vmatpush.bf16.msra.mxu0 %v1781
    %2234 = vmatmul.bf16.gmra.mxu0 %v1260
    %v2235 = vpop.f32.mrf.mxu0
    %v2236 = vadd.f32 0.0, %v2235
    %v2237 = vpop.f32.mrf.mxu0
    %v2238 = vadd.f32 0.0, %v2237
    %2239 = vdwg.mxu0
    %2240 = vmatpush.bf16.msra.mxu0 %v1901
    %2241 = vmatpush.bf16.msra.mxu0 %v1893
    %2242 = vmatpush.bf16.msra.mxu0 %v1885
    %2243 = vmatpush.bf16.msra.mxu0 %v1877
    %2244 = vmatpush.bf16.msra.mxu0 %v1869
    %2245 = vmatpush.bf16.msra.mxu0 %v1861
    %2246 = vmatpush.bf16.msra.mxu0 %v1853
    %2247 = vmatpush.bf16.msra.mxu0 %v1845
    %2248 = vmatmul.bf16.gmra.mxu0 %v1261
    %v2249 = vpop.f32.mrf.mxu0
    %v2250 = vadd.f32 %v2236, %v2249
    %v2251 = vpop.f32.mrf.mxu0
    %v2252 = vadd.f32 %v2238, %v2251
    %2253 = vdwg.mxu0
    %v2254 = vxor.u32 %v2054, 2147483648
    %v2255 = vxor.u32 %v2082, 2147483648
    %v2256 = vxor.u32 %v2110, 2147483648
    %v2257 = vxor.u32 %v2138, 2147483648
    %v2258 = vxor.u32 %v2056, 2147483648
    %v2259 = vxor.u32 %v2084, 2147483648
    %v2260 = vxor.u32 %v2112, 2147483648
    %v2261 = vxor.u32 %v2140, 2147483648
    %v2262 = vmul.f32 %v2254, 1.442695
    %v2263 = vpow.pop %v2262
    %v2264 = vmul.f32 %v2255, 1.442695
    %v2265 = vpow.pop %v2264
    %v2266 = vmul.f32 %v2256, 1.442695
    %v2267 = vpow.pop %v2266
    %v2268 = vmul.f32 %v2257, 1.442695
    %v2269 = vpow.pop %v2268
    %v2270 = vmul.f32 %v2258, 1.442695
    %v2271 = vpow.pop %v2270
    %v2272 = vmul.f32 %v2259, 1.442695
    %v2273 = vpow.pop %v2272
    %v2274 = vmul.f32 %v2260, 1.442695
    %v2275 = vpow.pop %v2274
    %v2276 = vmul.f32 %v2261, 1.442695
    %v2277 = vpow.pop %v2276
    %v2278 = vadd.f32 %v2263, 1.0
    %v2279 = vadd.f32 %v2265, 1.0
    %v2280 = vadd.f32 %v2267, 1.0
    %v2281 = vadd.f32 %v2269, 1.0
    %v2282 = vadd.f32 %v2271, 1.0
    %v2283 = vadd.f32 %v2273, 1.0
    %v2284 = vadd.f32 %v2275, 1.0
    %v2285 = vadd.f32 %v2277, 1.0
    %v2286 = vrcp.pop %v2278
    %v2287 = vmul.f32 %v2278, %v2286
    %v2288 = vsub.f32 1.0, %v2287
    %v2289 = vmul.f32 %v2286, %v2288
    %v2290 = vadd.f32 %v2286, %v2289
    %vm2291 = vweird.f32 %v2278
    %vm2292 = vweird.f32 %v2286
    %vm2293 = vmor %vm2291, %vm2292
    %v2294 = vsel %vm2293, %v2286, %v2290
    %v2295 = vand.u32 2147483647, %v2278
    %vm2296 = vcmp.eq.f32.partialorder %v2295, 8.507059e+37
    %v2297 = vand.u32 %v2278, 2147483648
    %v2298 = vor.u32 1.1754944e-38, %v2297
    %v2299 = vsel %vm2296, %v2298, %v2294
    %v2300 = vmul.f32 1.0, %v2299
    %v2301 = vrcp.pop %v2279
    %v2302 = vmul.f32 %v2279, %v2301
    %v2303 = vsub.f32 1.0, %v2302
    %v2304 = vmul.f32 %v2301, %v2303
    %v2305 = vadd.f32 %v2301, %v2304
    %vm2306 = vweird.f32 %v2279
    %vm2307 = vweird.f32 %v2301
    %vm2308 = vmor %vm2306, %vm2307
    %v2309 = vsel %vm2308, %v2301, %v2305
    %v2310 = vand.u32 2147483647, %v2279
    %vm2311 = vcmp.eq.f32.partialorder %v2310, 8.507059e+37
    %v2312 = vand.u32 %v2279, 2147483648
    %v2313 = vor.u32 1.1754944e-38, %v2312
    %v2314 = vsel %vm2311, %v2313, %v2309
    %v2315 = vmul.f32 1.0, %v2314
    %v2316 = vrcp.pop %v2280
    %v2317 = vmul.f32 %v2280, %v2316
    %v2318 = vsub.f32 1.0, %v2317
    %v2319 = vmul.f32 %v2316, %v2318
    %v2320 = vadd.f32 %v2316, %v2319
    %vm2321 = vweird.f32 %v2280
    %vm2322 = vweird.f32 %v2316
    %vm2323 = vmor %vm2321, %vm2322
    %v2324 = vsel %vm2323, %v2316, %v2320
    %v2325 = vand.u32 2147483647, %v2280
    %vm2326 = vcmp.eq.f32.partialorder %v2325, 8.507059e+37
    %v2327 = vand.u32 %v2280, 2147483648
    %v2328 = vor.u32 1.1754944e-38, %v2327
    %v2329 = vsel %vm2326, %v2328, %v2324
    %v2330 = vmul.f32 1.0, %v2329
    %v2331 = vrcp.pop %v2281
    %v2332 = vmul.f32 %v2281, %v2331
    %v2333 = vsub.f32 1.0, %v2332
    %v2334 = vmul.f32 %v2331, %v2333
    %v2335 = vadd.f32 %v2331, %v2334
    %vm2336 = vweird.f32 %v2281
    %vm2337 = vweird.f32 %v2331
    %vm2338 = vmor %vm2336, %vm2337
    %v2339 = vsel %vm2338, %v2331, %v2335
    %v2340 = vand.u32 2147483647, %v2281
    %vm2341 = vcmp.eq.f32.partialorder %v2340, 8.507059e+37
    %v2342 = vand.u32 %v2281, 2147483648
    %v2343 = vor.u32 1.1754944e-38, %v2342
    %v2344 = vsel %vm2341, %v2343, %v2339
    %v2345 = vmul.f32 1.0, %v2344
    %v2346 = vrcp.pop %v2282
    %v2347 = vmul.f32 %v2282, %v2346
    %v2348 = vsub.f32 1.0, %v2347
    %v2349 = vmul.f32 %v2346, %v2348
    %v2350 = vadd.f32 %v2346, %v2349
    %vm2351 = vweird.f32 %v2282
    %vm2352 = vweird.f32 %v2346
    %vm2353 = vmor %vm2351, %vm2352
    %v2354 = vsel %vm2353, %v2346, %v2350
    %v2355 = vand.u32 2147483647, %v2282
    %vm2356 = vcmp.eq.f32.partialorder %v2355, 8.507059e+37
    %v2357 = vand.u32 %v2282, 2147483648
    %v2358 = vor.u32 1.1754944e-38, %v2357
    %v2359 = vsel %vm2356, %v2358, %v2354
    %v2360 = vmul.f32 1.0, %v2359
    %v2361 = vrcp.pop %v2283
    %v2362 = vmul.f32 %v2283, %v2361
    %v2363 = vsub.f32 1.0, %v2362
    %v2364 = vmul.f32 %v2361, %v2363
    %v2365 = vadd.f32 %v2361, %v2364
    %vm2366 = vweird.f32 %v2283
    %vm2367 = vweird.f32 %v2361
    %vm2368 = vmor %vm2366, %vm2367
    %v2369 = vsel %vm2368, %v2361, %v2365
    %v2370 = vand.u32 2147483647, %v2283
    %vm2371 = vcmp.eq.f32.partialorder %v2370, 8.507059e+37
    %v2372 = vand.u32 %v2283, 2147483648
    %v2373 = vor.u32 1.1754944e-38, %v2372
    %v2374 = vsel %vm2371, %v2373, %v2369
    %v2375 = vmul.f32 1.0, %v2374
    %v2376 = vrcp.pop %v2284
    %v2377 = vmul.f32 %v2284, %v2376
    %v2378 = vsub.f32 1.0, %v2377
    %v2379 = vmul.f32 %v2376, %v2378
    %v2380 = vadd.f32 %v2376, %v2379
    %vm2381 = vweird.f32 %v2284
    %vm2382 = vweird.f32 %v2376
    %vm2383 = vmor %vm2381, %vm2382
    %v2384 = vsel %vm2383, %v2376, %v2380
    %v2385 = vand.u32 2147483647, %v2284
    %vm2386 = vcmp.eq.f32.partialorder %v2385, 8.507059e+37
    %v2387 = vand.u32 %v2284, 2147483648
    %v2388 = vor.u32 1.1754944e-38, %v2387
    %v2389 = vsel %vm2386, %v2388, %v2384
    %v2390 = vmul.f32 1.0, %v2389
    %v2391 = vrcp.pop %v2285
    %v2392 = vmul.f32 %v2285, %v2391
    %v2393 = vsub.f32 1.0, %v2392
    %v2394 = vmul.f32 %v2391, %v2393
    %v2395 = vadd.f32 %v2391, %v2394
    %vm2396 = vweird.f32 %v2285
    %vm2397 = vweird.f32 %v2391
    %vm2398 = vmor %vm2396, %vm2397
    %v2399 = vsel %vm2398, %v2391, %v2395
    %v2400 = vand.u32 2147483647, %v2285
    %vm2401 = vcmp.eq.f32.partialorder %v2400, 8.507059e+37
    %v2402 = vand.u32 %v2285, 2147483648
    %v2403 = vor.u32 1.1754944e-38, %v2402
    %v2404 = vsel %vm2401, %v2403, %v2399
    %v2405 = vmul.f32 1.0, %v2404
    %v2406 = vmul.f32 %v2054, %v2300
    %v2407 = vmul.f32 %v2082, %v2315
    %v2408 = vmul.f32 %v2110, %v2330
    %v2409 = vmul.f32 %v2138, %v2345
    %v2410 = vmul.f32 %v2056, %v2360
    %v2411 = vmul.f32 %v2084, %v2375
    %v2412 = vmul.f32 %v2112, %v2390
    %v2413 = vmul.f32 %v2140, %v2405
    %v2414 = vmul.f32 %v2406, %v2166
    %v2415 = vmul.f32 %v2407, %v2194
    %v2416 = vmul.f32 %v2408, %v2222
    %v2417 = vmul.f32 %v2409, %v2250
    %v2418 = vmul.f32 %v2410, %v2168
    %v2419 = vmul.f32 %v2411, %v2196
    %v2420 = vmul.f32 %v2412, %v2224
    %v2421 = vmul.f32 %v2413, %v2252
    %v2422 = vpack.c.bf16 %v2418, %v2414
    %v2423 = vpack.c.bf16 %v2419, %v2415
    %v2424 = vpack.c.bf16 %v2420, %v2416
    %v2425 = vpack.c.bf16 %v2421, %v2417
    %v2426 = vld [vmem:[#allocation19] sm:$0xff]
    %v2427 = vld [vmem:[#allocation19 + $0x8] sm:$0xff]
    %v2428 = vld [vmem:[#allocation19 + $0x10] sm:$0xff]
    %v2429 = vld [vmem:[#allocation19 + $0x18] sm:$0xff]
    %v2430 = vld [vmem:[#allocation19 + $0x20] sm:$0xff]
    %v2431 = vld [vmem:[#allocation19 + $0x28] sm:$0xff]
    %v2432 = vld [vmem:[#allocation19 + $0x30] sm:$0xff]
    %v2433 = vld [vmem:[#allocation19 + $0x38] sm:$0xff]
    %v2434 = vld [vmem:[#allocation19 + $0x40] sm:$0xff]
    %v2435 = vld [vmem:[#allocation19 + $0x48] sm:$0xff]
    %v2436 = vld [vmem:[#allocation19 + $0x50] sm:$0xff]
    %v2437 = vld [vmem:[#allocation19 + $0x58] sm:$0xff]
    %v2438 = vld [vmem:[#allocation19 + $0x60] sm:$0xff]
    %v2439 = vld [vmem:[#allocation19 + $0x68] sm:$0xff]
    %v2440 = vld [vmem:[#allocation19 + $0x70] sm:$0xff]
    %v2441 = vld [vmem:[#allocation19 + $0x78] sm:$0xff]
    %v2442 = vld [vmem:[#allocation19 + $0x80] sm:$0xff]
    %v2443 = vld [vmem:[#allocation19 + $0x88] sm:$0xff]
    %v2444 = vld [vmem:[#allocation19 + $0x90] sm:$0xff]
    %v2445 = vld [vmem:[#allocation19 + $0x98] sm:$0xff]
    %v2446 = vld [vmem:[#allocation19 + $0xa0] sm:$0xff]
    %v2447 = vld [vmem:[#allocation19 + $0xa8] sm:$0xff]
    %v2448 = vld [vmem:[#allocation19 + $0xb0] sm:$0xff]
    %v2449 = vld [vmem:[#allocation19 + $0xb8] sm:$0xff]
    %v2450 = vld [vmem:[#allocation19 + $0xc0] sm:$0xff]
    %v2451 = vld [vmem:[#allocation19 + $0xc8] sm:$0xff]
    %v2452 = vld [vmem:[#allocation19 + $0xd0] sm:$0xff]
    %v2453 = vld [vmem:[#allocation19 + $0xd8] sm:$0xff]
    %v2454 = vld [vmem:[#allocation19 + $0xe0] sm:$0xff]
    %v2455 = vld [vmem:[#allocation19 + $0xe8] sm:$0xff]
    %v2456 = vld [vmem:[#allocation19 + $0xf0] sm:$0xff]
    %v2457 = vld [vmem:[#allocation19 + $0xf8] sm:$0xff]
    %v2458 = vld [vmem:[#allocation19 + $0x100] sm:$0xff]
    %v2459 = vld [vmem:[#allocation19 + $0x108] sm:$0xff]
    %v2460 = vld [vmem:[#allocation19 + $0x110] sm:$0xff]
    %v2461 = vld [vmem:[#allocation19 + $0x118] sm:$0xff]
    %v2462 = vld [vmem:[#allocation19 + $0x120] sm:$0xff]
    %v2463 = vld [vmem:[#allocation19 + $0x128] sm:$0xff]
    %v2464 = vld [vmem:[#allocation19 + $0x130] sm:$0xff]
    %v2465 = vld [vmem:[#allocation19 + $0x138] sm:$0xff]
    %v2466 = vld [vmem:[#allocation19 + $0x140] sm:$0xff]
    %v2467 = vld [vmem:[#allocation19 + $0x148] sm:$0xff]
    %v2468 = vld [vmem:[#allocation19 + $0x150] sm:$0xff]
    %v2469 = vld [vmem:[#allocation19 + $0x158] sm:$0xff]
    %v2470 = vld [vmem:[#allocation19 + $0x160] sm:$0xff]
    %v2471 = vld [vmem:[#allocation19 + $0x168] sm:$0xff]
    %v2472 = vld [vmem:[#allocation19 + $0x170] sm:$0xff]
    %v2473 = vld [vmem:[#allocation19 + $0x178] sm:$0xff]
    %v2474 = vld [vmem:[#allocation19 + $0x180] sm:$0xff]
    %v2475 = vld [vmem:[#allocation19 + $0x188] sm:$0xff]
    %v2476 = vld [vmem:[#allocation19 + $0x190] sm:$0xff]
    %v2477 = vld [vmem:[#allocation19 + $0x198] sm:$0xff]
    %v2478 = vld [vmem:[#allocation19 + $0x1a0] sm:$0xff]
    %v2479 = vld [vmem:[#allocation19 + $0x1a8] sm:$0xff]
    %v2480 = vld [vmem:[#allocation19 + $0x1b0] sm:$0xff]
    %v2481 = vld [vmem:[#allocation19 + $0x1b8] sm:$0xff]
    %v2482 = vld [vmem:[#allocation19 + $0x1c0] sm:$0xff]
    %v2483 = vld [vmem:[#allocation19 + $0x1c8] sm:$0xff]
    %v2484 = vld [vmem:[#allocation19 + $0x1d0] sm:$0xff]
    %v2485 = vld [vmem:[#allocation19 + $0x1d8] sm:$0xff]
    %v2486 = vld [vmem:[#allocation19 + $0x1e0] sm:$0xff]
    %v2487 = vld [vmem:[#allocation19 + $0x1e8] sm:$0xff]
    %v2488 = vld [vmem:[#allocation19 + $0x1f0] sm:$0xff]
    %v2489 = vld [vmem:[#allocation19 + $0x1f8] sm:$0xff]
    %v2554 = vunpack.c.l.b16 %v2426
    %v2555 = vunpack.c.h.b16 %v2426
    %v2556 = vunpack.c.l.b16 %v2427
    %v2557 = vunpack.c.h.b16 %v2427
    %v2558 = vunpack.c.l.b16 %v2428
    %v2559 = vunpack.c.h.b16 %v2428
    %v2560 = vunpack.c.l.b16 %v2429
    %v2561 = vunpack.c.h.b16 %v2429
    %v2562 = vunpack.c.l.b16 %v2430
    %v2563 = vunpack.c.h.b16 %v2430
    %v2564 = vunpack.c.l.b16 %v2431
    %v2565 = vunpack.c.h.b16 %v2431
    %v2566 = vunpack.c.l.b16 %v2432
    %v2567 = vunpack.c.h.b16 %v2432
    %v2568 = vunpack.c.l.b16 %v2433
    %v2569 = vunpack.c.h.b16 %v2433
    %v2570 = vunpack.c.l.b16 %v2434
    %v2571 = vunpack.c.h.b16 %v2434
    %v2572 = vunpack.c.l.b16 %v2435
    %v2573 = vunpack.c.h.b16 %v2435
    %v2574 = vunpack.c.l.b16 %v2436
    %v2575 = vunpack.c.h.b16 %v2436
    %v2576 = vunpack.c.l.b16 %v2437
    %v2577 = vunpack.c.h.b16 %v2437
    %v2578 = vunpack.c.l.b16 %v2438
    %v2579 = vunpack.c.h.b16 %v2438
    %v2580 = vunpack.c.l.b16 %v2439
    %v2581 = vunpack.c.h.b16 %v2439
    %v2582 = vunpack.c.l.b16 %v2440
    %v2583 = vunpack.c.h.b16 %v2440
    %v2584 = vunpack.c.l.b16 %v2441
    %v2585 = vunpack.c.h.b16 %v2441
    %v2586 = vunpack.c.l.b16 %v2442
    %v2587 = vunpack.c.h.b16 %v2442
    %v2588 = vunpack.c.l.b16 %v2443
    %v2589 = vunpack.c.h.b16 %v2443
    %v2590 = vunpack.c.l.b16 %v2444
    %v2591 = vunpack.c.h.b16 %v2444
    %v2592 = vunpack.c.l.b16 %v2445
    %v2593 = vunpack.c.h.b16 %v2445
    %v2594 = vunpack.c.l.b16 %v2446
    %v2595 = vunpack.c.h.b16 %v2446
    %v2596 = vunpack.c.l.b16 %v2447
    %v2597 = vunpack.c.h.b16 %v2447
    %v2598 = vunpack.c.l.b16 %v2448
    %v2599 = vunpack.c.h.b16 %v2448
    %v2600 = vunpack.c.l.b16 %v2449
    %v2601 = vunpack.c.h.b16 %v2449
    %v2602 = vunpack.c.l.b16 %v2450
    %v2603 = vunpack.c.h.b16 %v2450
    %v2604 = vunpack.c.l.b16 %v2451
    %v2605 = vunpack.c.h.b16 %v2451
    %v2606 = vunpack.c.l.b16 %v2452
    %v2607 = vunpack.c.h.b16 %v2452
    %v2608 = vunpack.c.l.b16 %v2453
    %v2609 = vunpack.c.h.b16 %v2453
    %v2610 = vunpack.c.l.b16 %v2454
    %v2611 = vunpack.c.h.b16 %v2454
    %v2612 = vunpack.c.l.b16 %v2455
    %v2613 = vunpack.c.h.b16 %v2455
    %v2614 = vunpack.c.l.b16 %v2456
    %v2615 = vunpack.c.h.b16 %v2456
    %v2616 = vunpack.c.l.b16 %v2457
    %v2617 = vunpack.c.h.b16 %v2457
    %v2618 = vunpack.c.l.b16 %v2458
    %v2619 = vunpack.c.h.b16 %v2458
    %v2620 = vunpack.c.l.b16 %v2459
    %v2621 = vunpack.c.h.b16 %v2459
    %v2622 = vunpack.c.l.b16 %v2460
    %v2623 = vunpack.c.h.b16 %v2460
    %v2624 = vunpack.c.l.b16 %v2461
    %v2625 = vunpack.c.h.b16 %v2461
    %v2626 = vunpack.c.l.b16 %v2462
    %v2627 = vunpack.c.h.b16 %v2462
    %v2628 = vunpack.c.l.b16 %v2463
    %v2629 = vunpack.c.h.b16 %v2463
    %v2630 = vunpack.c.l.b16 %v2464
    %v2631 = vunpack.c.h.b16 %v2464
    %v2632 = vunpack.c.l.b16 %v2465
    %v2633 = vunpack.c.h.b16 %v2465
    %v2634 = vunpack.c.l.b16 %v2466
    %v2635 = vunpack.c.h.b16 %v2466
    %v2636 = vunpack.c.l.b16 %v2467
    %v2637 = vunpack.c.h.b16 %v2467
    %v2638 = vunpack.c.l.b16 %v2468
    %v2639 = vunpack.c.h.b16 %v2468
    %v2640 = vunpack.c.l.b16 %v2469
    %v2641 = vunpack.c.h.b16 %v2469
    %v2642 = vunpack.c.l.b16 %v2470
    %v2643 = vunpack.c.h.b16 %v2470
    %v2644 = vunpack.c.l.b16 %v2471
    %v2645 = vunpack.c.h.b16 %v2471
    %v2646 = vunpack.c.l.b16 %v2472
    %v2647 = vunpack.c.h.b16 %v2472
    %v2648 = vunpack.c.l.b16 %v2473
    %v2649 = vunpack.c.h.b16 %v2473
    %v2650 = vunpack.c.l.b16 %v2474
    %v2651 = vunpack.c.h.b16 %v2474
    %v2652 = vunpack.c.l.b16 %v2475
    %v2653 = vunpack.c.h.b16 %v2475
    %v2654 = vunpack.c.l.b16 %v2476
    %v2655 = vunpack.c.h.b16 %v2476
    %v2656 = vunpack.c.l.b16 %v2477
    %v2657 = vunpack.c.h.b16 %v2477
    %v2658 = vunpack.c.l.b16 %v2478
    %v2659 = vunpack.c.h.b16 %v2478
    %v2660 = vunpack.c.l.b16 %v2479
    %v2661 = vunpack.c.h.b16 %v2479
    %v2662 = vunpack.c.l.b16 %v2480
    %v2663 = vunpack.c.h.b16 %v2480
    %v2664 = vunpack.c.l.b16 %v2481
    %v2665 = vunpack.c.h.b16 %v2481
    %v2666 = vunpack.c.l.b16 %v2482
    %v2667 = vunpack.c.h.b16 %v2482
    %v2668 = vunpack.c.l.b16 %v2483
    %v2669 = vunpack.c.h.b16 %v2483
    %v2670 = vunpack.c.l.b16 %v2484
    %v2671 = vunpack.c.h.b16 %v2484
    %v2672 = vunpack.c.l.b16 %v2485
    %v2673 = vunpack.c.h.b16 %v2485
    %v2674 = vunpack.c.l.b16 %v2486
    %v2675 = vunpack.c.h.b16 %v2486
    %v2676 = vunpack.c.l.b16 %v2487
    %v2677 = vunpack.c.h.b16 %v2487
    %v2678 = vunpack.c.l.b16 %v2488
    %v2679 = vunpack.c.h.b16 %v2488
    %v2680 = vunpack.c.l.b16 %v2489
    %v2681 = vunpack.c.h.b16 %v2489
    %v2682 = vpack.c.b16 %v2556, %v2554
    %v2683 = vpack.c.b16 %v2557, %v2555
    %v2684 = vpack.c.b16 %v2560, %v2558
    %v2685 = vpack.c.b16 %v2561, %v2559
    %v2686 = vpack.c.b16 %v2564, %v2562
    %v2687 = vpack.c.b16 %v2565, %v2563
    %v2688 = vpack.c.b16 %v2568, %v2566
    %v2689 = vpack.c.b16 %v2569, %v2567
    %v2690 = vpack.c.b16 %v2572, %v2570
    %v2691 = vpack.c.b16 %v2573, %v2571
    %v2692 = vpack.c.b16 %v2576, %v2574
    %v2693 = vpack.c.b16 %v2577, %v2575
    %v2694 = vpack.c.b16 %v2580, %v2578
    %v2695 = vpack.c.b16 %v2581, %v2579
    %v2696 = vpack.c.b16 %v2584, %v2582
    %v2697 = vpack.c.b16 %v2585, %v2583
    %v2698 = vpack.c.b16 %v2588, %v2586
    %v2699 = vpack.c.b16 %v2589, %v2587
    %v2700 = vpack.c.b16 %v2592, %v2590
    %v2701 = vpack.c.b16 %v2593, %v2591
    %v2702 = vpack.c.b16 %v2596, %v2594
    %v2703 = vpack.c.b16 %v2597, %v2595
    %v2704 = vpack.c.b16 %v2600, %v2598
    %v2705 = vpack.c.b16 %v2601, %v2599
    %v2706 = vpack.c.b16 %v2604, %v2602
    %v2707 = vpack.c.b16 %v2605, %v2603
    %v2708 = vpack.c.b16 %v2608, %v2606
    %v2709 = vpack.c.b16 %v2609, %v2607
    %v2710 = vpack.c.b16 %v2612, %v2610
    %v2711 = vpack.c.b16 %v2613, %v2611
    %v2712 = vpack.c.b16 %v2616, %v2614
    %v2713 = vpack.c.b16 %v2617, %v2615
    %v2714 = vpack.c.b16 %v2620, %v2618
    %v2715 = vpack.c.b16 %v2621, %v2619
    %v2716 = vpack.c.b16 %v2624, %v2622
    %v2717 = vpack.c.b16 %v2625, %v2623
    %v2718 = vpack.c.b16 %v2628, %v2626
    %v2719 = vpack.c.b16 %v2629, %v2627
    %v2720 = vpack.c.b16 %v2632, %v2630
    %v2721 = vpack.c.b16 %v2633, %v2631
    %v2722 = vpack.c.b16 %v2636, %v2634
    %v2723 = vpack.c.b16 %v2637, %v2635
    %v2724 = vpack.c.b16 %v2640, %v2638
    %v2725 = vpack.c.b16 %v2641, %v2639
    %v2726 = vpack.c.b16 %v2644, %v2642
    %v2727 = vpack.c.b16 %v2645, %v2643
    %v2728 = vpack.c.b16 %v2648, %v2646
    %v2729 = vpack.c.b16 %v2649, %v2647
    %v2730 = vpack.c.b16 %v2652, %v2650
    %v2731 = vpack.c.b16 %v2653, %v2651
    %v2732 = vpack.c.b16 %v2656, %v2654
    %v2733 = vpack.c.b16 %v2657, %v2655
    %v2734 = vpack.c.b16 %v2660, %v2658
    %v2735 = vpack.c.b16 %v2661, %v2659
    %v2736 = vpack.c.b16 %v2664, %v2662
    %v2737 = vpack.c.b16 %v2665, %v2663
    %v2738 = vpack.c.b16 %v2668, %v2666
    %v2739 = vpack.c.b16 %v2669, %v2667
    %v2740 = vpack.c.b16 %v2672, %v2670
    %v2741 = vpack.c.b16 %v2673, %v2671
    %v2742 = vpack.c.b16 %v2676, %v2674
    %v2743 = vpack.c.b16 %v2677, %v2675
    %v2744 = vpack.c.b16 %v2680, %v2678
    %v2745 = vpack.c.b16 %v2681, %v2679
    %2810 = vmatpush.bf16.msra.mxu0 %v2696
    %2811 = vmatpush.bf16.msra.mxu0 %v2694
    %2812 = vmatpush.bf16.msra.mxu0 %v2692
    %2813 = vmatpush.bf16.msra.mxu0 %v2690
    %2814 = vmatpush.bf16.msra.mxu0 %v2688
    %2815 = vmatpush.bf16.msra.mxu0 %v2686
    %2816 = vmatpush.bf16.msra.mxu0 %v2684
    %2817 = vmatpush.bf16.msra.mxu0 %v2682
    %2818 = vmatmul.bf16.gmra.mxu0 %v2422
    %v2819 = vpop.f32.mrf.mxu0
    %v2820 = vadd.f32 %v1180, %v2819
    %v2821 = vpop.f32.mrf.mxu0
    %v2822 = vadd.f32 %v1182, %v2821
    %2823 = vdwg.mxu0
    %2824 = vmatpush.bf16.msra.mxu0 %v2712
    %2825 = vmatpush.bf16.msra.mxu0 %v2710
    %2826 = vmatpush.bf16.msra.mxu0 %v2708
    %2827 = vmatpush.bf16.msra.mxu0 %v2706
    %2828 = vmatpush.bf16.msra.mxu0 %v2704
    %2829 = vmatpush.bf16.msra.mxu0 %v2702
    %2830 = vmatpush.bf16.msra.mxu0 %v2700
    %2831 = vmatpush.bf16.msra.mxu0 %v2698
    %2832 = vmatmul.bf16.gmra.mxu0 %v2423
    %v2833 = vpop.f32.mrf.mxu0
    %v2834 = vadd.f32 %v2820, %v2833
    %v2835 = vpop.f32.mrf.mxu0
    %v2836 = vadd.f32 %v2822, %v2835
    %2837 = vdwg.mxu0
    %2838 = vmatpush.bf16.msra.mxu0 %v2728
    %2839 = vmatpush.bf16.msra.mxu0 %v2726
    %2840 = vmatpush.bf16.msra.mxu0 %v2724
    %2841 = vmatpush.bf16.msra.mxu0 %v2722
    %2842 = vmatpush.bf16.msra.mxu0 %v2720
    %2843 = vmatpush.bf16.msra.mxu0 %v2718
    %2844 = vmatpush.bf16.msra.mxu0 %v2716
    %2845 = vmatpush.bf16.msra.mxu0 %v2714
    %2846 = vmatmul.bf16.gmra.mxu0 %v2424
    %v2847 = vpop.f32.mrf.mxu0
    %v2848 = vadd.f32 %v2834, %v2847
    %v2849 = vpop.f32.mrf.mxu0
    %v2850 = vadd.f32 %v2836, %v2849
    %2851 = vdwg.mxu0
    %2852 = vmatpush.bf16.msra.mxu0 %v2744
    %2853 = vmatpush.bf16.msra.mxu0 %v2742
    %2854 = vmatpush.bf16.msra.mxu0 %v2740
    %2855 = vmatpush.bf16.msra.mxu0 %v2738
    %2856 = vmatpush.bf16.msra.mxu0 %v2736
    %2857 = vmatpush.bf16.msra.mxu0 %v2734
    %2858 = vmatpush.bf16.msra.mxu0 %v2732
    %2859 = vmatpush.bf16.msra.mxu0 %v2730
    %2860 = vmatmul.bf16.gmra.mxu0 %v2425
    %v2861 = vpop.f32.mrf.mxu0
    %v2862 = vadd.f32 %v2848, %v2861
    %v2863 = vpop.f32.mrf.mxu0
    %v2864 = vadd.f32 %v2850, %v2863
    %2865 = vdwg.mxu0
    %2866 = vmatpush.bf16.msra.mxu0 %v2697
    %2867 = vmatpush.bf16.msra.mxu0 %v2695
    %2868 = vmatpush.bf16.msra.mxu0 %v2693
    %2869 = vmatpush.bf16.msra.mxu0 %v2691
    %2870 = vmatpush.bf16.msra.mxu0 %v2689
    %2871 = vmatpush.bf16.msra.mxu0 %v2687
    %2872 = vmatpush.bf16.msra.mxu0 %v2685
    %2873 = vmatpush.bf16.msra.mxu0 %v2683
    %2874 = vmatmul.bf16.gmra.mxu0 %v2422
    %v2875 = vpop.f32.mrf.mxu0
    %v2876 = vadd.f32 %v1208, %v2875
    %v2877 = vpop.f32.mrf.mxu0
    %v2878 = vadd.f32 %v1210, %v2877
    %2879 = vdwg.mxu0
    %2880 = vmatpush.bf16.msra.mxu0 %v2713
    %2881 = vmatpush.bf16.msra.mxu0 %v2711
    %2882 = vmatpush.bf16.msra.mxu0 %v2709
    %2883 = vmatpush.bf16.msra.mxu0 %v2707
    %2884 = vmatpush.bf16.msra.mxu0 %v2705
    %2885 = vmatpush.bf16.msra.mxu0 %v2703
    %2886 = vmatpush.bf16.msra.mxu0 %v2701
    %2887 = vmatpush.bf16.msra.mxu0 %v2699
    %2888 = vmatmul.bf16.gmra.mxu0 %v2423
    %v2889 = vpop.f32.mrf.mxu0
    %v2890 = vadd.f32 %v2876, %v2889
    %v2891 = vpop.f32.mrf.mxu0
    %v2892 = vadd.f32 %v2878, %v2891
    %2893 = vdwg.mxu0
    %2894 = vmatpush.bf16.msra.mxu0 %v2729
    %2895 = vmatpush.bf16.msra.mxu0 %v2727
    %2896 = vmatpush.bf16.msra.mxu0 %v2725
    %2897 = vmatpush.bf16.msra.mxu0 %v2723
    %2898 = vmatpush.bf16.msra.mxu0 %v2721
    %2899 = vmatpush.bf16.msra.mxu0 %v2719
    %2900 = vmatpush.bf16.msra.mxu0 %v2717
    %2901 = vmatpush.bf16.msra.mxu0 %v2715
    %2902 = vmatmul.bf16.gmra.mxu0 %v2424
    %v2903 = vpop.f32.mrf.mxu0
    %v2904 = vadd.f32 %v2890, %v2903
    %v2905 = vpop.f32.mrf.mxu0
    %v2906 = vadd.f32 %v2892, %v2905
    %2907 = vdwg.mxu0
    %2908 = vmatpush.bf16.msra.mxu0 %v2745
    %2909 = vmatpush.bf16.msra.mxu0 %v2743
    %2910 = vmatpush.bf16.msra.mxu0 %v2741
    %2911 = vmatpush.bf16.msra.mxu0 %v2739
    %2912 = vmatpush.bf16.msra.mxu0 %v2737
    %2913 = vmatpush.bf16.msra.mxu0 %v2735
    %2914 = vmatpush.bf16.msra.mxu0 %v2733
    %2915 = vmatpush.bf16.msra.mxu0 %v2731
    %2916 = vmatmul.bf16.gmra.mxu0 %v2425
    %v2917 = vpop.f32.mrf.mxu0
    %v2918 = vadd.f32 %v2904, %v2917
    %v2919 = vpop.f32.mrf.mxu0
    %v2920 = vadd.f32 %v2906, %v2919
    %2921 = vdwg.mxu0
    %2922 = vst [vmem:[#allocation20] sm:$0xff] %v2862
    %2923 = vst [vmem:[#allocation20 + $0x8] sm:$0xff] %v2918
    %2924 = vst [vmem:[#allocation20 + $0x10] sm:$0xff] %v2864
    %2925 = vst [vmem:[#allocation20 + $0x18] sm:$0xff] %v2920
    // Predicated region
    $region94: #{tpu_custom_call.1} parent=1 // pred_check
      _
    $region95: #{tpu_custom_call.1} parent=1 // pred_check_branch
      %2927 = sbr.rel (0) target = $region97
    $region96: #{tpu_custom_call.1} parent=1 // pred_region
      %2929 = vsyncadd [#allocation4], 0
      %s2930 = sshll.u32 [#allocation20], 4
      %s2931 = int_to_ptr.vmem [resolvable:$true] %s2930
      %s2932 = sshll.u32 %s12, 4
      %s2933 = int_to_ptr.hbm [resolvable:$true] %s2932
      %2938 = dma.vmem_to_hbm [thread:$0]  %s2931, 512, %s2933, [#allocation4], 256, 256, 16
    $region97: #{tpu_custom_call.1} parent=1 // pred_fallthru
      _
    // Predicated region
    $region98: #{tpu_custom_call.1} parent=1 // pred_check
      _
    $region99: #{tpu_custom_call.1} parent=1 // pred_check_branch
      %2940 = sbr.rel (0) target = $region101
    $region100: #{tpu_custom_call.1} parent=1 // pred_region
      %2942 = dma.done [#allocation4], 512
    $region101: #{tpu_custom_call.1} parent=1 // pred_fallthru
      _
    %2943 = vsyncpa [#allocation3], 1
    %2944 = vsyncpa [#allocation6], 1
    %2945 = vsyncpa [#allocation9], 1
    %2946 = vsyncpa [#allocation12], 1
    %2947 = vsyncpa [#allocation15], 1
    %2948 = vsyncpa [#allocation18], 1
    %2949 = vsyncpa [#allocation4], 1

</llo_original>
